<compile_context>
chip_gen: v7x
topology: tpu7x:2x2x1
jax: 0.10.0
libtpu: 0.0.40
codegen_flags: <defaults>
</compile_context>

<pallas_src>
import jax
import jax.numpy as jnp
from jax.experimental import pallas as pl
from jax.experimental.pallas import tpu as pltpu


def _silu(x):
    return x * jax.nn.sigmoid(x)


def _round_up(x, m):
    return ((x + m - 1) // m) * m


def _vmem_budget():
    """Generation-aware scoped-VMEM limit and pairwise-intermediate budget."""
    phys = 64 * 1024 * 1024
    try:
        info = pltpu.get_tpu_info()
        phys = int(getattr(info, "vmem_capacity_bytes", phys) or phys)
    except Exception:
        pass
    # ~half of physical VMEM: 32 MiB on v7x (64 MiB phys), 64 MiB on v5e/v6e.
    limit = max(min(phys // 2, 96 * 1024 * 1024), 24 * 1024 * 1024)
    # ~55% of the scoped limit for the big (ti*tj, ...) pairwise intermediates;
    # the rest covers double-buffered blocks, weights, scratch and slack.
    pair_budget = (limit * 11) // 20
    return int(limit), int(pair_budget)


def _pick_tiles(n, h1, m_dim, pair_budget_bytes):
    """Pick (i_tile, j_tile), both dividing n, with a lane-dense j tile."""
    if n % 8 != 0:
        return n, n  # tiny / odd N: single block (reshape may relayout, stays correct)
    # lane-padded f32 bytes per (i, j) pair; x2 for pre/post-activation liveness
    per_pair = 4 * (2 * (_round_up(h1, 128) + _round_up(m_dim, 128)
                         + _round_up(4 * m_dim, 128)) + 8)
    max_pairs = max(pair_budget_bytes // per_pair, 64)
    divs = [t for t in range(8, n + 1, 8) if n % t == 0]
    # j tile: smallest lane-dense divisor (>=128, or n itself when n < 128)
    # that still leaves room for at least 8 i-rows.
    lane_ok = [t for t in divs if t >= min(128, n) and 8 * t <= max_pairs]
    if lane_ok:
        tj = lane_ok[0]
    else:
        fitting = [t for t in divs if 8 * t <= max_pairs]
        tj = fitting[-1] if fitting else divs[0]
    # i tile: largest divisor (capped at 256 to keep parallel grid blocks) that fits.
    ti_opts = [t for t in divs if t <= 256 and t * tj <= max_pairs]
    ti = ti_opts[-1] if ti_opts else divs[0]
    return ti, tj


def egnn_kernel(feats_i_ref, coors_i_ref, feats_j_ref, coors_j_ref,
                w1a_ref, w1b_ref, w1c_ref, b1_ref,
                w2_ref, b2_ref,
                w3_ref, b3_ref,
                w4r_ref, b4_ref,
                w5a_ref, w5b_ref, b5_ref,
                w6_ref, b6_ref,
                out_ref,
                m_acc, d_acc, a_scr):
    jb = pl.program_id(2)
    nj = pl.num_programs(2)

    feats_i = feats_i_ref[...]            # (ti, D)
    coors_i = coors_i_ref[...]            # (ti, 3)
    feats_j = feats_j_ref[...]            # (tj, D)
    coors_j = coors_j_ref[...]            # (tj, 3)
    ti, d = feats_i.shape
    tj = feats_j.shape[0]

    @pl.when(jb == 0)
    def _init():
        m_acc[...] = jnp.zeros_like(m_acc)
        d_acc[...] = jnp.zeros_like(d_acc)
        # j-invariant per-node half of edge-MLP layer 1, computed once per i tile.
        a_scr[...] = (jnp.dot(feats_i, w1a_ref[...],
                              preferred_element_type=jnp.float32) + b1_ref[...])

    # ---- rel_dist via centered Gram expansion (no (ti, tj, 3) tensor) ----
    center = jnp.mean(coors_j, axis=0, keepdims=True)                 # (1, 3)
    ci = coors_i - center                                             # (ti, 3)
    cj = coors_j - center                                             # (tj, 3)
    sq_i = jnp.sum(ci * ci, axis=-1, keepdims=True)                   # (ti, 1)
    sq_j = jnp.sum(cj * cj, axis=-1, keepdims=True)                   # (tj, 1)
    gram = jax.lax.dot_general(ci, cj, (((1,), (1,)), ((), ())),
                               preferred_element_type=jnp.float32)    # (ti, tj)
    rel_dist = jnp.maximum(sq_i + sq_j.reshape(1, tj) - 2.0 * gram, 0.0)

    # ---- edge MLP layer 1, decomposed over concat(feats_i, feats_j, rel_dist) ----
    a_term = a_scr[...]                                               # (ti, H1)
    b_term = jnp.dot(feats_j, w1b_ref[...],
                     preferred_element_type=jnp.float32)              # (tj, H1)
    w1c = w1c_ref[...]                                                # (1, H1)
    h1 = _silu(a_term[:, None, :] + b_term[None, :, :]
               + rel_dist[:, :, None] * w1c[None, :, :])              # (ti, tj, H1)

    # ---- edge MLP layer 2 (reshape is a view when tj is a multiple of 8) ----
    h1f = h1.reshape(ti * tj, h1.shape[-1])
    m_ij = _silu(jnp.dot(h1f, w2_ref[...],
                         preferred_element_type=jnp.float32) + b2_ref[...])   # (ti*tj, M)

    # ---- coors MLP; head = VPU mul + lane reduce (no 1-lane MXU output) ----
    c1 = _silu(jnp.dot(m_ij, w3_ref[...],
                       preferred_element_type=jnp.float32) + b3_ref[...])     # (ti*tj, 4M)
    cw = (jnp.sum(c1 * w4r_ref[...], axis=-1, keepdims=True)
          + b4_ref[0, 0]).reshape(ti, tj)                                     # (ti, tj)

    # ---- accumulate coord update: sum_j cw_ij*(x_i - x_j) (translation invariant) ----
    cw_rowsum = jnp.sum(cw, axis=-1, keepdims=True)                           # (ti, 1)
    d_acc[...] += cw_rowsum * ci - jnp.dot(cw, cj,
                                           preferred_element_type=jnp.float32)

    # ---- accumulate messages m_i = sum_j m_ij ----
    m_acc[...] += m_ij.reshape(ti, tj, m_ij.shape[-1]).sum(axis=1)            # (ti, M)

    # ---- finalize on the last j tile ----
    @pl.when(jb == nj - 1)
    def _finalize():
        m_i = m_acc[...]                                                      # (ti, M)
        h5 = _silu(jnp.dot(feats_i, w5a_ref[...], preferred_element_type=jnp.float32)
                   + jnp.dot(m_i, w5b_ref[...], preferred_element_type=jnp.float32)
                   + b5_ref[...])                                             # (ti, 2D)
        node_out = (jnp.dot(h5, w6_ref[...], preferred_element_type=jnp.float32)
                    + b6_ref[...] + feats_i)                                  # (ti, D)
        coors_out = coors_i + d_acc[...]                                      # (ti, 3)

        outw = out_ref.shape[-1]
        out_ref[:, :d] = node_out
        out_ref[:, d:d + 3] = coors_out
        if outw > d + 3:   # static-shape guard: avoid zero-width store
            out_ref[:, d + 3:] = jnp.zeros((ti, outw - d - 3), jnp.float32)


def egnn_forward(feats, coors, params, *, i_tile=None, j_tile=None):
    B, N, D = feats.shape
    M = params["w2"].shape[1]
    H1 = params["w1a"].shape[1]

    vmem_limit, pair_budget = _vmem_budget()
    auto_ti, auto_tj = _pick_tiles(N, H1, M, pair_budget)
    Ti = auto_ti if i_tile is None else i_tile
    Tj = auto_tj if j_tile is None else j_tile
    assert N % Ti == 0, f"i_tile {Ti} must divide N={N}"
    assert N % Tj == 0, f"j_tile {Tj} must divide N={N}"
    nI, nJ = N // Ti, N // Tj
    OUTW = _round_up(D + 3, 128)

    weight_args = [
        ("w1a", params["w1a"]), ("w1b", params["w1b"]),
        ("w1c", params["w1c"]), ("b1", params["b1"]),
        ("w2", params["w2"]), ("b2", params["b2"]),
        ("w3", params["w3"]), ("b3", params["b3"]),
        ("w4r", params["w4"].reshape(1, -1)),
        ("b4", params["b4"].reshape(1, 1)),
        ("w5a", params["w5a"]), ("w5b", params["w5b"]), ("b5", params["b5"]),
        ("w6", params["w6"]), ("b6", params["b6"]),
    ]

    def _vmem_full(p):
        nd = p.ndim
        return pl.BlockSpec(p.shape, lambda b, i, j, _nd=nd: (0,) * _nd)

    weight_specs = []
    for name, p in weight_args:
        if name == "b4":
            # true scalar -> SMEM (no VMEM double-buffer slot / per-step DMA)
            weight_specs.append(pl.BlockSpec(memory_space=pltpu.MemorySpace.SMEM))
        else:
            weight_specs.append(_vmem_full(p))

    in_specs = [
        pl.BlockSpec((None, Ti, D), lambda b, i, j: (b, i, 0)),   # feats, i tile
        pl.BlockSpec((None, Ti, 3), lambda b, i, j: (b, i, 0)),   # coors, i tile
        pl.BlockSpec((None, Tj, D), lambda b, i, j: (b, j, 0)),   # feats, j tile
        pl.BlockSpec((None, Tj, 3), lambda b, i, j: (b, j, 0)),   # coors, j tile
    ] + weight_specs

    out_specs = pl.BlockSpec((None, Ti, OUTW), lambda b, i, j: (b, i, 0))
    out_shape = jax.ShapeDtypeStruct((B, N, OUTW), jnp.float32)

    packed = pl.pallas_call(
        egnn_kernel,
        out_shape=out_shape,
        grid_spec=pltpu.PrefetchScalarGridSpec(
            num_scalar_prefetch=0,
            grid=(B, nI, nJ),
            in_specs=in_specs,
            out_specs=out_specs,
            scratch_shapes=[
                pltpu.VMEM((Ti, M), jnp.float32),    # m_i accumulator
                pltpu.VMEM((Ti, 3), jnp.float32),    # coordinate-delta accumulator
                pltpu.VMEM((Ti, H1), jnp.float32),   # hoisted a_term (j-invariant)
            ],
        ),
        compiler_params=pltpu.CompilerParams(
            dimension_semantics=("parallel", "parallel", "arbitrary"),
            vmem_limit_bytes=vmem_limit,
        ),
    )(feats, coors, feats, coors, *[p for _, p in weight_args])

    node_out = packed[..., :D]
    coors_out = packed[..., D:D + 3]
    return node_out, coors_out


def make_params(key, dim, m_dim=16):
    """Deterministic synthetic parameters (PyTorch Linear => (in, out) layout here)."""
    edge_input_dim = 2 * dim + 1          # fourier_features=0, edge_dim=0
    h1 = edge_input_dim * 2
    sizes = {
        # edge_mlp: Linear(edge_input_dim, 2*edge_input_dim), SiLU, Linear(-, m_dim), SiLU
        "w1a": (dim, h1), "w1b": (dim, h1), "w1c": (1, h1), "b1": (1, h1),
        "w2": (h1, m_dim), "b2": (1, m_dim),
        # coors_mlp: Linear(m_dim, 4*m_dim), SiLU, Linear(-, 1)
        "w3": (m_dim, 4 * m_dim), "b3": (1, 4 * m_dim),
        "w4": (4 * m_dim, 1), "b4": (1, 1),
        # node_mlp: Linear(dim + m_dim, 2*dim), SiLU, Linear(-, dim)
        "w5a": (dim, 2 * dim), "w5b": (m_dim, 2 * dim), "b5": (1, 2 * dim),
        "w6": (2 * dim, dim), "b6": (1, dim),
    }
    params = {}
    keys = jax.random.split(key, len(sizes))
    for k, (name, shape) in zip(keys, sizes.items()):
        fan_in = shape[0] if shape[0] > 1 else 1
        params[name] = (jax.random.normal(k, shape, jnp.float32)
                        * (0.5 / jnp.sqrt(jnp.float32(fan_in))))
    return params


def egnn_reference(feats, coors, params):
    """Pure-JAX reference mirroring the PyTorch forward exactly."""
    hp = jax.lax.Precision.HIGHEST
    rel_coors = coors[:, :, None, :] - coors[:, None, :, :]          # (B,N,N,3)
    rel_dist = jnp.sum(rel_coors ** 2, axis=-1, keepdims=True)       # (B,N,N,1)
    B, N, D = feats.shape
    feats_i = jnp.broadcast_to(feats[:, :, None, :], (B, N, N, D))
    feats_j = jnp.broadcast_to(feats[:, None, :, :], (B, N, N, D))
    edge_input = jnp.concatenate([feats_i, feats_j, rel_dist], axis=-1)

    w1 = jnp.concatenate([params["w1a"], params["w1b"], params["w1c"]], axis=0)
    h = _silu(jnp.einsum("bijk,kh->bijh", edge_input, w1, precision=hp) + params["b1"][0])
    m_ij = _silu(jnp.einsum("bijk,kh->bijh", h, params["w2"], precision=hp) + params["b2"][0])

    c1 = _silu(jnp.einsum("bijk,kh->bijh", m_ij, params["w3"], precision=hp) + params["b3"][0])
    cw = (jnp.einsum("bijk,kh->bijh", c1, params["w4"], precision=hp) + params["b4"][0])[..., 0]

    coors_out = jnp.einsum("bij,bijc->bic", cw, rel_coors, precision=hp) + coors

    m_i = m_ij.sum(axis=-2)
    w5 = jnp.concatenate([params["w5a"], params["w5b"]], axis=0)
    node_in = jnp.concatenate([feats, m_i], axis=-1)
    h5 = _silu(jnp.einsum("bik,kh->bih", node_in, w5, precision=hp) + params["b5"][0])
    node_out = jnp.einsum("bik,kh->bih", h5, params["w6"], precision=hp) + params["b6"][0] + feats
    return node_out, coors_out


if __name__ == "__main__":
    key = jax.random.PRNGKey(0)

    # --- test 1: nominal small config (single i/j tile) ---
    B, N, D, M = 2, 8, 32, 16
    k_feat, k_coor, k_par = jax.random.split(key, 3)
    feats = jax.random.normal(k_feat, (B, N, D), jnp.float32)
    coors = jax.random.normal(k_coor, (B, N, 3), jnp.float32)
    params = make_params(k_par, D, M)

    node_out, coors_out = egnn_forward(feats, coors, params)
    node_out, coors_out = jax.block_until_ready((node_out, coors_out))
    node_exp, coors_exp = egnn_reference(feats, coors, params)
    assert node_out.shape == (B, N, D) and coors_out.shape == (B, N, 3)
    assert jnp.allclose(node_out, node_exp, atol=3e-3, rtol=3e-3), "node_out mismatch"
    assert jnp.allclose(coors_out, coors_exp, atol=3e-3, rtol=3e-3), "coors_out mismatch"

    # --- test 2: exercise the i-tiled + j-accumulation path (N=16, 2x2 tiles of 8) ---
    N2 = 16
    k_feat2, k_coor2 = jax.random.split(k_feat)
    feats2 = jax.random.normal(k_feat2, (B, N2, D), jnp.float32)
    coors2 = jax.random.normal(k_coor2, (B, N2, 3), jnp.float32)
    node_out2, coors_out2 = egnn_forward(feats2, coors2, params, i_tile=8, j_tile=8)
    node_out2, coors_out2 = jax.block_until_ready((node_out2, coors_out2))
    node_exp2, coors_exp2 = egnn_reference(feats2, coors2, params)
    assert jnp.allclose(node_out2, node_exp2, atol=3e-3, rtol=3e-3), "tiled node_out mismatch"
    assert jnp.allclose(coors_out2, coors_exp2, atol=3e-3, rtol=3e-3), "tiled coors_out mismatch"

    print("KERNEL_OK")
</pallas_src>

<mosaic_0001>
module attributes {stable_mosaic.version = 11 : i64} {
  func.func @egnn_kernel(%arg0: i32, %arg1: i32, %arg2: i32, %arg3: memref<1x8x32xf32, #tpu.memory_space<vmem>>, %arg4: memref<1x8x3xf32, #tpu.memory_space<vmem>>, %arg5: memref<1x8x32xf32, #tpu.memory_space<vmem>>, %arg6: memref<1x8x3xf32, #tpu.memory_space<vmem>>, %arg7: memref<32x130xf32, #tpu.memory_space<vmem>>, %arg8: memref<32x130xf32, #tpu.memory_space<vmem>>, %arg9: memref<1x130xf32, #tpu.memory_space<vmem>>, %arg10: memref<1x130xf32, #tpu.memory_space<vmem>>, %arg11: memref<130x16xf32, #tpu.memory_space<vmem>>, %arg12: memref<1x16xf32, #tpu.memory_space<vmem>>, %arg13: memref<16x64xf32, #tpu.memory_space<vmem>>, %arg14: memref<1x64xf32, #tpu.memory_space<vmem>>, %arg15: memref<1x64xf32, #tpu.memory_space<vmem>>, %arg16: memref<1x1xf32, #tpu.memory_space<smem>>, %arg17: memref<32x64xf32, #tpu.memory_space<vmem>>, %arg18: memref<16x64xf32, #tpu.memory_space<vmem>>, %arg19: memref<1x64xf32, #tpu.memory_space<vmem>>, %arg20: memref<64x32xf32, #tpu.memory_space<vmem>>, %arg21: memref<1x32xf32, #tpu.memory_space<vmem>>, %arg22: memref<1x8x128xf32, #tpu.memory_space<vmem>>, %arg23: memref<8x16xf32, #tpu.memory_space<vmem>>, %arg24: memref<8x3xf32, #tpu.memory_space<vmem>>, %arg25: memref<8x130xf32, #tpu.memory_space<vmem>>) attributes {dimension_semantics = [#tpu.dimension_semantics<parallel>, #tpu.dimension_semantics<parallel>, #tpu.dimension_semantics<arbitrary>], iteration_bounds = array<i64: 2, 1, 1>, scalar_prefetch = 0 : i64, scratch_operands = 3 : i64, tpu.core_type = #tpu.core_type<tc>, window_params = [{transform_indices = @transform_0, window_bounds = array<i64: 1, 8, 32>}, {transform_indices = @transform_1, window_bounds = array<i64: 1, 8, 3>}, {transform_indices = @transform_2, window_bounds = array<i64: 1, 8, 32>}, {transform_indices = @transform_3, window_bounds = array<i64: 1, 8, 3>}, {pipeline_mode = #tpu.pipeline_mode<synchronous>, transform_indices = @transform_4, window_bounds = array<i64: 32, 130>}, {pipeline_mode = #tpu.pipeline_mode<synchronous>, transform_indices = @transform_5, window_bounds = array<i64: 32, 130>}, {pipeline_mode = #tpu.pipeline_mode<synchronous>, transform_indices = @transform_6, window_bounds = array<i64: 1, 130>}, {pipeline_mode = #tpu.pipeline_mode<synchronous>, transform_indices = @transform_7, window_bounds = array<i64: 1, 130>}, {pipeline_mode = #tpu.pipeline_mode<synchronous>, transform_indices = @transform_8, window_bounds = array<i64: 130, 16>}, {pipeline_mode = #tpu.pipeline_mode<synchronous>, transform_indices = @transform_9, window_bounds = array<i64: 1, 16>}, {pipeline_mode = #tpu.pipeline_mode<synchronous>, transform_indices = @transform_10, window_bounds = array<i64: 16, 64>}, {pipeline_mode = #tpu.pipeline_mode<synchronous>, transform_indices = @transform_11, window_bounds = array<i64: 1, 64>}, {pipeline_mode = #tpu.pipeline_mode<synchronous>, transform_indices = @transform_12, window_bounds = array<i64: 1, 64>}, {transform_indices = @transform_13, window_bounds = array<i64: 1, 1>}, {pipeline_mode = #tpu.pipeline_mode<synchronous>, transform_indices = @transform_14, window_bounds = array<i64: 32, 64>}, {pipeline_mode = #tpu.pipeline_mode<synchronous>, transform_indices = @transform_15, window_bounds = array<i64: 16, 64>}, {pipeline_mode = #tpu.pipeline_mode<synchronous>, transform_indices = @transform_16, window_bounds = array<i64: 1, 64>}, {pipeline_mode = #tpu.pipeline_mode<synchronous>, transform_indices = @transform_17, window_bounds = array<i64: 64, 32>}, {pipeline_mode = #tpu.pipeline_mode<synchronous>, transform_indices = @transform_18, window_bounds = array<i64: 1, 32>}, {transform_indices = @transform_19, window_bounds = array<i64: 1, 8, 128>}]} {
    %c0 = arith.constant 0 : index
    %c0_0 = arith.constant 0 : index
    %c0_1 = arith.constant 0 : index
    %0 = vector.load %arg3[%c0, %c0_0, %c0_1] : memref<1x8x32xf32, #tpu.memory_space<vmem>>, vector<1x8x32xf32>
    %1 = vector.shape_cast %0 : vector<1x8x32xf32> to vector<8x32xf32>
    %c0_2 = arith.constant 0 : index
    %c0_3 = arith.constant 0 : index
    %c0_4 = arith.constant 0 : index
    %2 = vector.load %arg4[%c0_2, %c0_3, %c0_4] : memref<1x8x3xf32, #tpu.memory_space<vmem>>, vector<1x8x3xf32>
    %3 = vector.shape_cast %2 : vector<1x8x3xf32> to vector<8x3xf32>
    %c0_5 = arith.constant 0 : index
    %c0_6 = arith.constant 0 : index
    %c0_7 = arith.constant 0 : index
    %4 = vector.load %arg5[%c0_5, %c0_6, %c0_7] : memref<1x8x32xf32, #tpu.memory_space<vmem>>, vector<1x8x32xf32>
    %5 = vector.shape_cast %4 : vector<1x8x32xf32> to vector<8x32xf32>
    %c0_8 = arith.constant 0 : index
    %c0_9 = arith.constant 0 : index
    %c0_10 = arith.constant 0 : index
    %6 = vector.load %arg6[%c0_8, %c0_9, %c0_10] : memref<1x8x3xf32, #tpu.memory_space<vmem>>, vector<1x8x3xf32>
    %7 = vector.shape_cast %6 : vector<1x8x3xf32> to vector<8x3xf32>
    %c0_i32 = arith.constant 0 : i32
    %8 = arith.cmpi eq, %arg2, %c0_i32 : i32
    %9 = arith.extui %8 : i1 to i32
    %c0_i32_11 = arith.constant 0 : i32
    %10 = arith.cmpi ne, %9, %c0_i32_11 : i32
    scf.if %10 {
      %cst_56 = arith.constant 0.000000e+00 : f32
      %105 = vector.broadcast %cst_56 : f32 to vector<8x16xf32>
      %c0_57 = arith.constant 0 : index
      %c0_58 = arith.constant 0 : index
      %106 = vector.load %arg23[%c0_57, %c0_58] : memref<8x16xf32, #tpu.memory_space<vmem>>, vector<8x16xf32>
      tpu.vector_store %arg23[%c0_57, %c0_58], %105 {strides = array<i32>} : memref<8x16xf32, #tpu.memory_space<vmem>>, vector<8x16xf32>,
      %cst_59 = arith.constant 0.000000e+00 : f32
      %107 = vector.broadcast %cst_59 : f32 to vector<8x3xf32>
      %c0_60 = arith.constant 0 : index
      %c0_61 = arith.constant 0 : index
      %108 = vector.load %arg24[%c0_60, %c0_61] : memref<8x3xf32, #tpu.memory_space<vmem>>, vector<8x3xf32>
      tpu.vector_store %arg24[%c0_60, %c0_61], %107 {strides = array<i32>} : memref<8x3xf32, #tpu.memory_space<vmem>>, vector<8x3xf32>,
      %c0_62 = arith.constant 0 : index
      %c0_63 = arith.constant 0 : index
      %109 = vector.load %arg7[%c0_62, %c0_63] : memref<32x130xf32, #tpu.memory_space<vmem>>, vector<32x130xf32>
      %cst_64 = arith.constant dense<0.000000e+00> : vector<8x130xf32>
      %110 = tpu.matmul %1, %109, %cst_64 {dimension_numbers = #tpu.dot_dimension_numbers<[1], [0], [0], [1], [0, 0, 1, 1], [], []>} : vector<8x32xf32>, vector<32x130xf32>, vector<8x130xf32> -> vector<8x130xf32>
      %c0_65 = arith.constant 0 : index
      %c0_66 = arith.constant 0 : index
      %111 = vector.load %arg10[%c0_65, %c0_66] : memref<1x130xf32, #tpu.memory_space<vmem>>, vector<1x130xf32>
      %112 = vector.broadcast %111 : vector<1x130xf32> to vector<8x130xf32>
      %113 = arith.addf %110, %112 : vector<8x130xf32>
      %c0_67 = arith.constant 0 : index
      %c0_68 = arith.constant 0 : index
      %114 = vector.load %arg25[%c0_67, %c0_68] : memref<8x130xf32, #tpu.memory_space<vmem>>, vector<8x130xf32>
      tpu.vector_store %arg25[%c0_67, %c0_68], %113 {strides = array<i32>} : memref<8x130xf32, #tpu.memory_space<vmem>>, vector<8x130xf32>,
    } else {
    }
    %cst = arith.constant dense<0.000000e+00> : vector<3xf32>
    %11 = vector.multi_reduction <add>, %7, %cst [0] : vector<8x3xf32> to vector<3xf32>
    %12 = vector.shape_cast %11 : vector<3xf32> to vector<1x3xf32>
    %cst_12 = arith.constant 8.000000e+00 : f32
    %13 = vector.broadcast %cst_12 : f32 to vector<1x3xf32>
    %14 = arith.divf %12, %13 : vector<1x3xf32>
    %15 = vector.broadcast %14 : vector<1x3xf32> to vector<8x3xf32>
    %16 = arith.subf %3, %15 : vector<8x3xf32>
    %17 = vector.broadcast %14 : vector<1x3xf32> to vector<8x3xf32>
    %18 = arith.subf %7, %17 : vector<8x3xf32>
    %19 = arith.mulf %16, %16 : vector<8x3xf32>
    %cst_13 = arith.constant dense<0.000000e+00> : vector<8xf32>
    %20 = vector.multi_reduction <add>, %19, %cst_13 [1] : vector<8x3xf32> to vector<8xf32>
    %21 = vector.shape_cast %20 : vector<8xf32> to vector<8x1xf32>
    %22 = arith.mulf %18, %18 : vector<8x3xf32>
    %cst_14 = arith.constant dense<0.000000e+00> : vector<8xf32>
    %23 = vector.multi_reduction <add>, %22, %cst_14 [1] : vector<8x3xf32> to vector<8xf32>
    %24 = vector.shape_cast %23 : vector<8xf32> to vector<8x1xf32>
    %cst_15 = arith.constant dense<0.000000e+00> : vector<8x8xf32>
    %25 = tpu.matmul %16, %18, %cst_15 {dimension_numbers = #tpu.dot_dimension_numbers<[1], [1], [0], [0], [0, 0, 1, 0], [], []>} : vector<8x3xf32>, vector<8x3xf32>, vector<8x8xf32> -> vector<8x8xf32>
    %26 = vector.shape_cast %24 : vector<8x1xf32> to vector<1x8xf32>
    %27 = vector.broadcast %21 : vector<8x1xf32> to vector<8x8xf32>
    %28 = vector.broadcast %26 : vector<1x8xf32> to vector<8x8xf32>
    %29 = arith.addf %27, %28 : vector<8x8xf32>
    %cst_16 = arith.constant 2.000000e+00 : f32
    %30 = vector.broadcast %cst_16 : f32 to vector<8x8xf32>
    %31 = arith.mulf %30, %25 : vector<8x8xf32>
    %32 = arith.subf %29, %31 : vector<8x8xf32>
    %cst_17 = arith.constant 0.000000e+00 : f32
    %33 = vector.broadcast %cst_17 : f32 to vector<8x8xf32>
    %34 = arith.maximumf %32, %33 : vector<8x8xf32>
    %c0_18 = arith.constant 0 : index
    %c0_19 = arith.constant 0 : index
    %35 = vector.load %arg25[%c0_18, %c0_19] : memref<8x130xf32, #tpu.memory_space<vmem>>, vector<8x130xf32>
    %c0_20 = arith.constant 0 : index
    %c0_21 = arith.constant 0 : index
    %36 = vector.load %arg8[%c0_20, %c0_21] : memref<32x130xf32, #tpu.memory_space<vmem>>, vector<32x130xf32>
    %cst_22 = arith.constant dense<0.000000e+00> : vector<8x130xf32>
    %37 = tpu.matmul %5, %36, %cst_22 {dimension_numbers = #tpu.dot_dimension_numbers<[1], [0], [0], [1], [0, 0, 1, 1], [], []>} : vector<8x32xf32>, vector<32x130xf32>, vector<8x130xf32> -> vector<8x130xf32>
    %c0_23 = arith.constant 0 : index
    %c0_24 = arith.constant 0 : index
    %38 = vector.load %arg9[%c0_23, %c0_24] : memref<1x130xf32, #tpu.memory_space<vmem>>, vector<1x130xf32>
    %39 = vector.shape_cast %35 : vector<8x130xf32> to vector<8x1x130xf32>
    %40 = vector.shape_cast %37 : vector<8x130xf32> to vector<1x8x130xf32>
    %41 = vector.broadcast %39 : vector<8x1x130xf32> to vector<8x8x130xf32>
    %42 = vector.broadcast %40 : vector<1x8x130xf32> to vector<8x8x130xf32>
    %43 = arith.addf %41, %42 : vector<8x8x130xf32>
    %44 = vector.shape_cast %34 : vector<8x8xf32> to vector<8x8x1xf32>
    %45 = vector.shape_cast %38 : vector<1x130xf32> to vector<1x1x130xf32>
    %46 = vector.broadcast %44 : vector<8x8x1xf32> to vector<8x8x130xf32>
    %47 = vector.broadcast %45 : vector<1x1x130xf32> to vector<8x8x130xf32>
    %48 = arith.mulf %46, %47 : vector<8x8x130xf32>
    %49 = arith.addf %43, %48 : vector<8x8x130xf32>
    %50 = arith.negf %49 : vector<8x8x130xf32>
    %51 = math.exp %50 : vector<8x8x130xf32>
    %cst_25 = arith.constant 1.000000e+00 : f32
    %52 = vector.broadcast %cst_25 : f32 to vector<8x8x130xf32>
    %53 = arith.addf %52, %51 : vector<8x8x130xf32>
    %54 = arith.divf %52, %53 : vector<8x8x130xf32>
    %55 = arith.mulf %49, %54 : vector<8x8x130xf32>
    %56 = vector.shape_cast %55 : vector<8x8x130xf32> to vector<64x130xf32>
    %c0_26 = arith.constant 0 : index
    %c0_27 = arith.constant 0 : index
    %57 = vector.load %arg11[%c0_26, %c0_27] : memref<130x16xf32, #tpu.memory_space<vmem>>, vector<130x16xf32>
    %cst_28 = arith.constant dense<0.000000e+00> : vector<64x16xf32>
    %58 = tpu.matmul %56, %57, %cst_28 {dimension_numbers = #tpu.dot_dimension_numbers<[1], [0], [0], [1], [0, 0, 1, 1], [], []>} : vector<64x130xf32>, vector<130x16xf32>, vector<64x16xf32> -> vector<64x16xf32>
    %c0_29 = arith.constant 0 : index
    %c0_30 = arith.constant 0 : index
    %59 = vector.load %arg12[%c0_29, %c0_30] : memref<1x16xf32, #tpu.memory_space<vmem>>, vector<1x16xf32>
    %60 = vector.broadcast %59 : vector<1x16xf32> to vector<64x16xf32>
    %61 = arith.addf %58, %60 : vector<64x16xf32>
    %62 = arith.negf %61 : vector<64x16xf32>
    %63 = math.exp %62 : vector<64x16xf32>
    %cst_31 = arith.constant 1.000000e+00 : f32
    %64 = vector.broadcast %cst_31 : f32 to vector<64x16xf32>
    %65 = arith.addf %64, %63 : vector<64x16xf32>
    %66 = arith.divf %64, %65 : vector<64x16xf32>
    %67 = arith.mulf %61, %66 : vector<64x16xf32>
    %c0_32 = arith.constant 0 : index
    %c0_33 = arith.constant 0 : index
    %68 = vector.load %arg13[%c0_32, %c0_33] : memref<16x64xf32, #tpu.memory_space<vmem>>, vector<16x64xf32>
    %cst_34 = arith.constant dense<0.000000e+00> : vector<64x64xf32>
    %69 = tpu.matmul %67, %68, %cst_34 {dimension_numbers = #tpu.dot_dimension_numbers<[1], [0], [0], [1], [0, 0, 1, 1], [], []>} : vector<64x16xf32>, vector<16x64xf32>, vector<64x64xf32> -> vector<64x64xf32>
    %c0_35 = arith.constant 0 : index
    %c0_36 = arith.constant 0 : index
    %70 = vector.load %arg14[%c0_35, %c0_36] : memref<1x64xf32, #tpu.memory_space<vmem>>, vector<1x64xf32>
    %71 = vector.broadcast %70 : vector<1x64xf32> to vector<64x64xf32>
    %72 = arith.addf %69, %71 : vector<64x64xf32>
    %73 = arith.negf %72 : vector<64x64xf32>
    %74 = math.exp %73 : vector<64x64xf32>
    %cst_37 = arith.constant 1.000000e+00 : f32
    %75 = vector.broadcast %cst_37 : f32 to vector<64x64xf32>
    %76 = arith.addf %75, %74 : vector<64x64xf32>
    %77 = arith.divf %75, %76 : vector<64x64xf32>
    %78 = arith.mulf %72, %77 : vector<64x64xf32>
    %c0_38 = arith.constant 0 : index
    %c0_39 = arith.constant 0 : index
    %79 = vector.load %arg15[%c0_38, %c0_39] : memref<1x64xf32, #tpu.memory_space<vmem>>, vector<1x64xf32>
    %80 = vector.broadcast %79 : vector<1x64xf32> to vector<64x64xf32>
    %81 = arith.mulf %78, %80 : vector<64x64xf32>
    %cst_40 = arith.constant dense<0.000000e+00> : vector<64xf32>
    %82 = vector.multi_reduction <add>, %81, %cst_40 [1] : vector<64x64xf32> to vector<64xf32>
    %83 = vector.shape_cast %82 : vector<64xf32> to vector<64x1xf32>
    %c0_41 = arith.constant 0 : index
    %c0_42 = arith.constant 0 : index
    %84 = memref.load %arg16[%c0_41, %c0_42] : memref<1x1xf32, #tpu.memory_space<smem>>
    %85 = vector.broadcast %84 : f32 to vector<64x1xf32>
    %86 = arith.addf %83, %85 : vector<64x1xf32>
    %87 = vector.shape_cast %86 : vector<64x1xf32> to vector<8x8xf32>
    %cst_43 = arith.constant dense<0.000000e+00> : vector<8xf32>
    %88 = vector.multi_reduction <add>, %87, %cst_43 [1] : vector<8x8xf32> to vector<8xf32>
    %89 = vector.shape_cast %88 : vector<8xf32> to vector<8x1xf32>
    %c0_44 = arith.constant 0 : index
    %c0_45 = arith.constant 0 : index
    %90 = vector.load %arg24[%c0_44, %c0_45] : memref<8x3xf32, #tpu.memory_space<vmem>>, vector<8x3xf32>
    %91 = vector.broadcast %89 : vector<8x1xf32> to vector<8x3xf32>
    %92 = arith.mulf %91, %16 : vector<8x3xf32>
    %cst_46 = arith.constant dense<0.000000e+00> : vector<8x3xf32>
    %93 = tpu.matmul %87, %18, %cst_46 {dimension_numbers = #tpu.dot_dimension_numbers<[1], [0], [0], [1], [0, 0, 1, 1], [], []>} : vector<8x8xf32>, vector<8x3xf32>, vector<8x3xf32> -> vector<8x3xf32>
    %94 = arith.subf %92, %93 : vector<8x3xf32>
    %95 = arith.addf %90, %94 : vector<8x3xf32>
    %c0_47 = arith.constant 0 : index
    %c0_48 = arith.constant 0 : index
    %96 = vector.load %arg24[%c0_47, %c0_48] : memref<8x3xf32, #tpu.memory_space<vmem>>, vector<8x3xf32>
    tpu.vector_store %arg24[%c0_47, %c0_48], %95 {strides = array<i32>} : memref<8x3xf32, #tpu.memory_space<vmem>>, vector<8x3xf32>,
    %c0_49 = arith.constant 0 : index
    %c0_50 = arith.constant 0 : index
    %97 = vector.load %arg23[%c0_49, %c0_50] : memref<8x16xf32, #tpu.memory_space<vmem>>, vector<8x16xf32>
    %98 = vector.shape_cast %67 : vector<64x16xf32> to vector<8x8x16xf32>
    %cst_51 = arith.constant dense<0.000000e+00> : vector<8x16xf32>
    %99 = vector.multi_reduction <add>, %98, %cst_51 [1] : vector<8x8x16xf32> to vector<8x16xf32>
    %100 = arith.addf %97, %99 : vector<8x16xf32>
    %c0_52 = arith.constant 0 : index
    %c0_53 = arith.constant 0 : index
    %101 = vector.load %arg23[%c0_52, %c0_53] : memref<8x16xf32, #tpu.memory_space<vmem>>, vector<8x16xf32>
    tpu.vector_store %arg23[%c0_52, %c0_53], %100 {strides = array<i32>} : memref<8x16xf32, #tpu.memory_space<vmem>>, vector<8x16xf32>,
    %c0_i32_54 = arith.constant 0 : i32
    %102 = arith.cmpi eq, %arg2, %c0_i32_54 : i32
    %103 = arith.extui %102 : i1 to i32
    %c0_i32_55 = arith.constant 0 : i32
    %104 = arith.cmpi ne, %103, %c0_i32_55 : i32
    scf.if %104 {
      %c0_56 = arith.constant 0 : index
      %c0_57 = arith.constant 0 : index
      %105 = vector.load %arg23[%c0_56, %c0_57] : memref<8x16xf32, #tpu.memory_space<vmem>>, vector<8x16xf32>
      %c0_58 = arith.constant 0 : index
      %c0_59 = arith.constant 0 : index
      %106 = vector.load %arg17[%c0_58, %c0_59] : memref<32x64xf32, #tpu.memory_space<vmem>>, vector<32x64xf32>
      %cst_60 = arith.constant dense<0.000000e+00> : vector<8x64xf32>
      %107 = tpu.matmul %1, %106, %cst_60 {dimension_numbers = #tpu.dot_dimension_numbers<[1], [0], [0], [1], [0, 0, 1, 1], [], []>} : vector<8x32xf32>, vector<32x64xf32>, vector<8x64xf32> -> vector<8x64xf32>
      %c0_61 = arith.constant 0 : index
      %c0_62 = arith.constant 0 : index
      %108 = vector.load %arg18[%c0_61, %c0_62] : memref<16x64xf32, #tpu.memory_space<vmem>>, vector<16x64xf32>
      %cst_63 = arith.constant dense<0.000000e+00> : vector<8x64xf32>
      %109 = tpu.matmul %105, %108, %cst_63 {dimension_numbers = #tpu.dot_dimension_numbers<[1], [0], [0], [1], [0, 0, 1, 1], [], []>} : vector<8x16xf32>, vector<16x64xf32>, vector<8x64xf32> -> vector<8x64xf32>
      %110 = arith.addf %107, %109 : vector<8x64xf32>
      %c0_64 = arith.constant 0 : index
      %c0_65 = arith.constant 0 : index
      %111 = vector.load %arg19[%c0_64, %c0_65] : memref<1x64xf32, #tpu.memory_space<vmem>>, vector<1x64xf32>
      %112 = vector.broadcast %111 : vector<1x64xf32> to vector<8x64xf32>
      %113 = arith.addf %110, %112 : vector<8x64xf32>
      %114 = arith.negf %113 : vector<8x64xf32>
      %115 = math.exp %114 : vector<8x64xf32>
      %cst_66 = arith.constant 1.000000e+00 : f32
      %116 = vector.broadcast %cst_66 : f32 to vector<8x64xf32>
      %117 = arith.addf %116, %115 : vector<8x64xf32>
      %118 = arith.divf %116, %117 : vector<8x64xf32>
      %119 = arith.mulf %113, %118 : vector<8x64xf32>
      %c0_67 = arith.constant 0 : index
      %c0_68 = arith.constant 0 : index
      %120 = vector.load %arg20[%c0_67, %c0_68] : memref<64x32xf32, #tpu.memory_space<vmem>>, vector<64x32xf32>
      %cst_69 = arith.constant dense<0.000000e+00> : vector<8x32xf32>
      %121 = tpu.matmul %119, %120, %cst_69 {dimension_numbers = #tpu.dot_dimension_numbers<[1], [0], [0], [1], [0, 0, 1, 1], [], []>} : vector<8x64xf32>, vector<64x32xf32>, vector<8x32xf32> -> vector<8x32xf32>
      %c0_70 = arith.constant 0 : index
      %c0_71 = arith.constant 0 : index
      %122 = vector.load %arg21[%c0_70, %c0_71] : memref<1x32xf32, #tpu.memory_space<vmem>>, vector<1x32xf32>
      %123 = vector.broadcast %122 : vector<1x32xf32> to vector<8x32xf32>
      %124 = arith.addf %121, %123 : vector<8x32xf32>
      %125 = arith.addf %124, %1 : vector<8x32xf32>
      %c0_72 = arith.constant 0 : index
      %c0_73 = arith.constant 0 : index
      %126 = vector.load %arg24[%c0_72, %c0_73] : memref<8x3xf32, #tpu.memory_space<vmem>>, vector<8x3xf32>
      %127 = arith.addf %3, %126 : vector<8x3xf32>
      %c0_74 = arith.constant 0 : index
      %c0_75 = arith.constant 0 : index
      %c0_76 = arith.constant 0 : index
      %128 = vector.load %arg22[%c0_74, %c0_75, %c0_76] : memref<1x8x128xf32, #tpu.memory_space<vmem>>, vector<1x8x32xf32>
      %129 = vector.shape_cast %128 : vector<1x8x32xf32> to vector<8x32xf32>
      %130 = vector.shape_cast %125 : vector<8x32xf32> to vector<1x8x32xf32>
      tpu.vector_store %arg22[%c0_74, %c0_75, %c0_76], %130 {strides = array<i32>} : memref<1x8x128xf32, #tpu.memory_space<vmem>>, vector<1x8x32xf32>,
      %c0_77 = arith.constant 0 : index
      %c0_78 = arith.constant 0 : index
      %c32 = arith.constant 32 : index
      %131 = vector.load %arg22[%c0_77, %c0_78, %c32] : memref<1x8x128xf32, #tpu.memory_space<vmem>>, vector<1x8x3xf32>
      %132 = vector.shape_cast %131 : vector<1x8x3xf32> to vector<8x3xf32>
      %133 = vector.shape_cast %127 : vector<8x3xf32> to vector<1x8x3xf32>
      tpu.vector_store %arg22[%c0_77, %c0_78, %c32], %133 {strides = array<i32>} : memref<1x8x128xf32, #tpu.memory_space<vmem>>, vector<1x8x3xf32>,
      %cst_79 = arith.constant 0.000000e+00 : f32
      %134 = vector.broadcast %cst_79 : f32 to vector<8x93xf32>
      %c0_80 = arith.constant 0 : index
      %c0_81 = arith.constant 0 : index
      %c35 = arith.constant 35 : index
      %135 = vector.load %arg22[%c0_80, %c0_81, %c35] : memref<1x8x128xf32, #tpu.memory_space<vmem>>, vector<1x8x93xf32>
      %136 = vector.shape_cast %135 : vector<1x8x93xf32> to vector<8x93xf32>
      %137 = vector.shape_cast %134 : vector<8x93xf32> to vector<1x8x93xf32>
      tpu.vector_store %arg22[%c0_80, %c0_81, %c35], %137 {strides = array<i32>} : memref<1x8x128xf32, #tpu.memory_space<vmem>>, vector<1x8x93xf32>,
    } else {
    }
    return
  }
  func.func @transform_0(%arg0: i32, %arg1: i32, %arg2: i32) -> (i32, i32, i32) {
    %c0_i32 = arith.constant 0 : i32
    %c0_i32_0 = arith.constant 0 : i32
    return %arg0, %arg1, %c0_i32 : i32, i32, i32
  }
  func.func @transform_1(%arg0: i32, %arg1: i32, %arg2: i32) -> (i32, i32, i32) {
    %c0_i32 = arith.constant 0 : i32
    %c0_i32_0 = arith.constant 0 : i32
    return %arg0, %arg1, %c0_i32 : i32, i32, i32
  }
  func.func @transform_2(%arg0: i32, %arg1: i32, %arg2: i32) -> (i32, i32, i32) {
    %c0_i32 = arith.constant 0 : i32
    %c0_i32_0 = arith.constant 0 : i32
    return %arg0, %arg2, %c0_i32 : i32, i32, i32
  }
  func.func @transform_3(%arg0: i32, %arg1: i32, %arg2: i32) -> (i32, i32, i32) {
    %c0_i32 = arith.constant 0 : i32
    %c0_i32_0 = arith.constant 0 : i32
    return %arg0, %arg2, %c0_i32 : i32, i32, i32
  }
  func.func @transform_4(%arg0: i32, %arg1: i32, %arg2: i32) -> (i32, i32) {
    %c0_i32 = arith.constant 0 : i32
    %c0_i32_0 = arith.constant 0 : i32
    %c0_i32_1 = arith.constant 0 : i32
    return %c0_i32, %c0_i32_0 : i32, i32
  }
  func.func @transform_5(%arg0: i32, %arg1: i32, %arg2: i32) -> (i32, i32) {
    %c0_i32 = arith.constant 0 : i32
    %c0_i32_0 = arith.constant 0 : i32
    %c0_i32_1 = arith.constant 0 : i32
    return %c0_i32, %c0_i32_0 : i32, i32
  }
  func.func @transform_6(%arg0: i32, %arg1: i32, %arg2: i32) -> (i32, i32) {
    %c0_i32 = arith.constant 0 : i32
    %c0_i32_0 = arith.constant 0 : i32
    %c0_i32_1 = arith.constant 0 : i32
    return %c0_i32, %c0_i32_0 : i32, i32
  }
  func.func @transform_7(%arg0: i32, %arg1: i32, %arg2: i32) -> (i32, i32) {
    %c0_i32 = arith.constant 0 : i32
    %c0_i32_0 = arith.constant 0 : i32
    %c0_i32_1 = arith.constant 0 : i32
    return %c0_i32, %c0_i32_0 : i32, i32
  }
  func.func @transform_8(%arg0: i32, %arg1: i32, %arg2: i32) -> (i32, i32) {
    %c0_i32 = arith.constant 0 : i32
    %c0_i32_0 = arith.constant 0 : i32
    %c0_i32_1 = arith.constant 0 : i32
    return %c0_i32, %c0_i32_0 : i32, i32
  }
  func.func @transform_9(%arg0: i32, %arg1: i32, %arg2: i32) -> (i32, i32) {
    %c0_i32 = arith.constant 0 : i32
    %c0_i32_0 = arith.constant 0 : i32
    %c0_i32_1 = arith.constant 0 : i32
    return %c0_i32, %c0_i32_0 : i32, i32
  }
  func.func @transform_10(%arg0: i32, %arg1: i32, %arg2: i32) -> (i32, i32) {
    %c0_i32 = arith.constant 0 : i32
    %c0_i32_0 = arith.constant 0 : i32
    %c0_i32_1 = arith.constant 0 : i32
    return %c0_i32, %c0_i32_0 : i32, i32
  }
  func.func @transform_11(%arg0: i32, %arg1: i32, %arg2: i32) -> (i32, i32) {
    %c0_i32 = arith.constant 0 : i32
    %c0_i32_0 = arith.constant 0 : i32
    %c0_i32_1 = arith.constant 0 : i32
    return %c0_i32, %c0_i32_0 : i32, i32
  }
  func.func @transform_12(%arg0: i32, %arg1: i32, %arg2: i32) -> (i32, i32) {
    %c0_i32 = arith.constant 0 : i32
    %c0_i32_0 = arith.constant 0 : i32
    %c0_i32_1 = arith.constant 0 : i32
    return %c0_i32, %c0_i32_0 : i32, i32
  }
  func.func @transform_13(%arg0: i32, %arg1: i32, %arg2: i32) -> (i32, i32) {
    %c0_i32 = arith.constant 0 : i32
    %c0_i32_0 = arith.constant 0 : i32
    %c0_i32_1 = arith.constant 0 : i32
    return %c0_i32, %c0_i32_0 : i32, i32
  }
  func.func @transform_14(%arg0: i32, %arg1: i32, %arg2: i32) -> (i32, i32) {
    %c0_i32 = arith.constant 0 : i32
    %c0_i32_0 = arith.constant 0 : i32
    %c0_i32_1 = arith.constant 0 : i32
    return %c0_i32, %c0_i32_0 : i32, i32
  }
  func.func @transform_15(%arg0: i32, %arg1: i32, %arg2: i32) -> (i32, i32) {
    %c0_i32 = arith.constant 0 : i32
    %c0_i32_0 = arith.constant 0 : i32
    %c0_i32_1 = arith.constant 0 : i32
    return %c0_i32, %c0_i32_0 : i32, i32
  }
  func.func @transform_16(%arg0: i32, %arg1: i32, %arg2: i32) -> (i32, i32) {
    %c0_i32 = arith.constant 0 : i32
    %c0_i32_0 = arith.constant 0 : i32
    %c0_i32_1 = arith.constant 0 : i32
    return %c0_i32, %c0_i32_0 : i32, i32
  }
  func.func @transform_17(%arg0: i32, %arg1: i32, %arg2: i32) -> (i32, i32) {
    %c0_i32 = arith.constant 0 : i32
    %c0_i32_0 = arith.constant 0 : i32
    %c0_i32_1 = arith.constant 0 : i32
    return %c0_i32, %c0_i32_0 : i32, i32
  }
  func.func @transform_18(%arg0: i32, %arg1: i32, %arg2: i32) -> (i32, i32) {
    %c0_i32 = arith.constant 0 : i32
    %c0_i32_0 = arith.constant 0 : i32
    %c0_i32_1 = arith.constant 0 : i32
    return %c0_i32, %c0_i32_0 : i32, i32
  }
  func.func @transform_19(%arg0: i32, %arg1: i32, %arg2: i32) -> (i32, i32, i32) {
    %c0_i32 = arith.constant 0 : i32
    %c0_i32_0 = arith.constant 0 : i32
    return %arg0, %arg1, %c0_i32 : i32, i32, i32
  }
}

</mosaic_0001>

<llo_original>
// kernel: tpu_custom_call.1
$region0: #{tpu_custom_call.1}
  #allocation0 [shape = 'u32[]', space=smem, size = 0x4, offset = 0x4, fixed_abs, tag = 'smem constant byte address 0x4 - core index']
  #allocation1 [shape = 'u32[144,128]{1,0:T(1,128)}', space=vmem, size = 0x12000, scoped, tag = 'internal scratch']
  #allocation2 [shape = 'f32[8,16]{1,0:T(8,128)}', space=vmem, size = 0x1000, scoped, tag = 'scratch operand']
  #allocation3 [shape = 'f32[8,3]{1,0:T(8,128)}', space=vmem, size = 0x1000, scoped, tag = 'scratch operand']
  #allocation4 [shape = 'f32[8,130]{1,0:T(8,128)}', space=vmem, size = 0x2000, scoped, tag = 'scratch operand']
  #allocation5 [shape = 'f32[1,1]{1,0:T(1,128)S(6)}', space=smem, size = 0x200, scoped, tag = 'scoped memory for tpu_custom_call.1']
  %s0 = inlined_call_operand.vmem [shape: f32[2,8,32], index: 0, kind: input, shape index: {}]
  %s1 = inlined_call_operand.vmem [shape: f32[2,8,3], index: 1, kind: input, shape index: {}]
  %s2 = inlined_call_operand.vmem [shape: f32[2,8,32], index: 2, kind: input, shape index: {}]
  %s3 = inlined_call_operand.vmem [shape: f32[2,8,3], index: 3, kind: input, shape index: {}]
  %s4 = inlined_call_operand.vmem [shape: f32[32,130], index: 4, kind: input, shape index: {}]
  %s5 = inlined_call_operand.vmem [shape: f32[32,130], index: 5, kind: input, shape index: {}]
  %s6 = inlined_call_operand.vmem [shape: f32[1,130], index: 6, kind: input, shape index: {}]
  %s7 = inlined_call_operand.vmem [shape: f32[1,130], index: 7, kind: input, shape index: {}]
  %s8 = inlined_call_operand.vmem [shape: f32[130,16], index: 8, kind: input, shape index: {}]
  %s9 = inlined_call_operand.vmem [shape: f32[1,16], index: 9, kind: input, shape index: {}]
  %s10 = inlined_call_operand.vmem [shape: f32[16,64], index: 10, kind: input, shape index: {}]
  %s11 = inlined_call_operand.vmem [shape: f32[1,64], index: 11, kind: input, shape index: {}]
  %s12 = inlined_call_operand.vmem [shape: f32[1,64], index: 12, kind: input, shape index: {}]
  %s13 = inlined_call_operand.<no memory space> [shape: f32[1,1], index: 13, kind: input, shape index: {}]
  %s14 = inlined_call_operand.vmem [shape: f32[32,64], index: 14, kind: input, shape index: {}]
  %s15 = inlined_call_operand.vmem [shape: f32[16,64], index: 15, kind: input, shape index: {}]
  %s16 = inlined_call_operand.vmem [shape: f32[1,64], index: 16, kind: input, shape index: {}]
  %s17 = inlined_call_operand.vmem [shape: f32[64,32], index: 17, kind: input, shape index: {}]
  %s18 = inlined_call_operand.vmem [shape: f32[1,32], index: 18, kind: input, shape index: {}]
  %s19 = inlined_call_operand.hbm [shape: f32[2,8,128], index: 19, kind: output, shape index: {}]
  %s20 = sld [smem:[#allocation0]]
  $region117: #{tpu_custom_call.1} parent=0
    _
  %s22 = ssub.s32 1, %s20
  %s23 = scalar_select 0, %s22, %s20
  %24 = sst [smem:[#allocation5]] %s13
  $region1: #{tpu_custom_call.1} parent=0
    #allocation6 [shape = 'u8[8192]{0}', space=vmem, size = 0x2000, scoped, tag = 'output window, operand 0']
    #allocation7 [shape = 's32[2]{0}', space=sflag, size = 0x8, scoped, tag = 'scoped memory for tpu_custom_call.1']
    %25 = vsyncpa [#allocation7], 0
    %s26 = scalar_lea.sflag [#allocation7], 1
    %27 = vsyncpa %s26, 0
    loop: start=0, step=1, limit=4
    $region2: #{tpu_custom_call.1} parent=1 // loop_pre_header
      _
    $region3: #{tpu_custom_call.1} parent=1 // loop_header
      %s29 = sphi 0, %s33
      %p30 = scmp.ge.s32.totalorder %s29, 4
      %s36 = sphi 0, %s55
      %s37 = sphi 0, %s51
      %s38 = sphi 0, %s47
      %s39 = sphi 0, %s36
      %s40 = sphi 0, %s37
      %s41 = sphi 0, %s38
      %s42 = sphi 0, %s39
      %s43 = sphi 0, %s40
      %s44 = sphi 0, %s41
      %s60 = sphi 0, %s62
      %s63 = sphi 0, %s60
      %s64 = sphi 0, %s63
      %s80 = sphi 0, %s64
      %s88 = sphi 0, %s90
      %s91 = sphi 0, %s88
      %s92 = sphi 0, %s91
      %s108 = sphi 0, %s92
      %s116 = sphi 0, %s118
      %s119 = sphi 0, %s116
      %s120 = sphi 0, %s119
      %s136 = sphi 0, %s120
      %s144 = sphi 0, %s146
      %s147 = sphi 0, %s144
      %s148 = sphi 0, %s147
      %s164 = sphi 0, %s148
      %s168 = sphi 0, %s168
      %s170 = sphi 0, %s168
      %s171 = sphi 0, %s170
      %s185 = sphi 0, %s171
      %s189 = sphi 0, %s189
      %s191 = sphi 0, %s189
      %s192 = sphi 0, %s191
      %s206 = sphi 0, %s192
      %s210 = sphi 0, %s210
      %s212 = sphi 0, %s210
      %s213 = sphi 0, %s212
      %s227 = sphi 0, %s213
      %s231 = sphi 0, %s231
      %s233 = sphi 0, %s231
      %s234 = sphi 0, %s233
      %s248 = sphi 0, %s234
      %s252 = sphi 0, %s252
      %s254 = sphi 0, %s252
      %s255 = sphi 0, %s254
      %s269 = sphi 0, %s255
      %s273 = sphi 0, %s273
      %s275 = sphi 0, %s273
      %s276 = sphi 0, %s275
      %s290 = sphi 0, %s276
      %s294 = sphi 0, %s294
      %s296 = sphi 0, %s294
      %s297 = sphi 0, %s296
      %s311 = sphi 0, %s297
      %s315 = sphi 0, %s315
      %s317 = sphi 0, %s315
      %s318 = sphi 0, %s317
      %s332 = sphi 0, %s318
      %s336 = sphi 0, %s336
      %s338 = sphi 0, %s336
      %s339 = sphi 0, %s338
      %s353 = sphi 0, %s339
      %s357 = sphi 0, %s357
      %s359 = sphi 0, %s357
      %s360 = sphi 0, %s359
      %s374 = sphi 0, %s360
      %s378 = sphi 0, %s378
      %s380 = sphi 0, %s378
      %s381 = sphi 0, %s380
      %s395 = sphi 0, %s381
      %s399 = sphi 0, %s399
      %s401 = sphi 0, %s399
      %s402 = sphi 0, %s401
      %s416 = sphi 0, %s402
      %s420 = sphi 0, %s420
      %s422 = sphi 0, %s420
      %s423 = sphi 0, %s422
      %s437 = sphi 0, %s423
      %s441 = sphi 0, %s441
      %s443 = sphi 0, %s441
      %s444 = sphi 0, %s443
      %s458 = sphi 0, %s444
      %s462 = sphi 0, %s462
      %s464 = sphi 0, %s462
      %s465 = sphi 0, %s464
      %s479 = sphi 0, %s465
      %s487 = sphi 0, %s489
      %s490 = sphi 0, %s487
      %s491 = sphi 0, %s490
      %s507 = sphi 0, %s491
    $region4: #{tpu_custom_call.1} parent=1 // loop_header_branch
      %32 = sbr.rel (%p30) target = $region8
    $region5: #{tpu_custom_call.1} parent=1 // loop_body
      %s34 = ssub.s32 %s29, 1
      %s35 = ssub.s32 %s29, 2
      %s45 = sadd.s32 1, %s38
      %p46 = scmp.ge.s32.totalorder %s45, 1
      %s47 = scalar_select %p46, 0, %s45
      %s48 = sadd.s32 1, %s37
      %s49 = scalar_select %p46, %s48, %s37
      %p50 = scmp.ge.s32.totalorder %s49, 1
      %s51 = scalar_select %p50, 0, %s49
      %s52 = sadd.s32 1, %s36
      %s53 = scalar_select %p50, %s52, %s36
      %p54 = scmp.ge.s32.totalorder %s53, 2
      %s55 = scalar_select %p54, 0, %s53
      %s56 = ssub.s32 %s36, %s55
      %s57 = ssub.s32 %s37, %s51
      %s58 = sor.u32 %s56, %s57
      %p59 = scmp.eq.s32.totalorder %s58, 0
      %s61 = sadd.s32 %s60, 1
      %s62 = scalar_select %p59, %s60, %s61
      %p65 = pneg %p59
      %p66 = scmp.eq.s32.totalorder %s29, 1
      %p67 = por %p65, %p66
      %p68 = scmp.ne.s32.totalorder %s60, %s63
      %p69 = scmp.eq.s32.totalorder %s29, 0
      %p70 = por %p68, %p69
      %p71 = scmp.ne.s32.totalorder %s60, %s63
      %p72 = scmp.eq.s32.totalorder %s34, 1
      %p73 = por %p71, %p72
      %p74 = scmp.ne.s32.totalorder %s63, %s64
      %p75 = scmp.eq.s32.totalorder %s34, 0
      %p76 = por %p74, %p75
      %p77 = scmp.ne.s32.totalorder %s63, %s64
      %p78 = scmp.eq.s32.totalorder %s35, 1
      %p79 = por %p77, %p78
      %p81 = scmp.ne.s32.totalorder %s64, %s80
      %p82 = scmp.eq.s32.totalorder %s35, 0
      %p83 = por %p81, %p82
      %s84 = ssub.s32 %s36, %s55
      %s85 = ssub.s32 %s37, %s51
      %s86 = sor.u32 %s84, %s85
      %p87 = scmp.eq.s32.totalorder %s86, 0
      %s89 = sadd.s32 %s88, 1
      %s90 = scalar_select %p87, %s88, %s89
      %p93 = pneg %p87
      %p94 = scmp.eq.s32.totalorder %s29, 1
      %p95 = por %p93, %p94
      %p96 = scmp.ne.s32.totalorder %s88, %s91
      %p97 = scmp.eq.s32.totalorder %s29, 0
      %p98 = por %p96, %p97
      %p99 = scmp.ne.s32.totalorder %s88, %s91
      %p100 = scmp.eq.s32.totalorder %s34, 1
      %p101 = por %p99, %p100
      %p102 = scmp.ne.s32.totalorder %s91, %s92
      %p103 = scmp.eq.s32.totalorder %s34, 0
      %p104 = por %p102, %p103
      %p105 = scmp.ne.s32.totalorder %s91, %s92
      %p106 = scmp.eq.s32.totalorder %s35, 1
      %p107 = por %p105, %p106
      %p109 = scmp.ne.s32.totalorder %s92, %s108
      %p110 = scmp.eq.s32.totalorder %s35, 0
      %p111 = por %p109, %p110
      %s112 = ssub.s32 %s36, %s55
      %s113 = ssub.s32 %s38, %s47
      %s114 = sor.u32 %s112, %s113
      %p115 = scmp.eq.s32.totalorder %s114, 0
      %s117 = sadd.s32 %s116, 1
      %s118 = scalar_select %p115, %s116, %s117
      %p121 = pneg %p115
      %p122 = scmp.eq.s32.totalorder %s29, 1
      %p123 = por %p121, %p122
      %p124 = scmp.ne.s32.totalorder %s116, %s119
      %p125 = scmp.eq.s32.totalorder %s29, 0
      %p126 = por %p124, %p125
      %p127 = scmp.ne.s32.totalorder %s116, %s119
      %p128 = scmp.eq.s32.totalorder %s34, 1
      %p129 = por %p127, %p128
      %p130 = scmp.ne.s32.totalorder %s119, %s120
      %p131 = scmp.eq.s32.totalorder %s34, 0
      %p132 = por %p130, %p131
      %p133 = scmp.ne.s32.totalorder %s119, %s120
      %p134 = scmp.eq.s32.totalorder %s35, 1
      %p135 = por %p133, %p134
      %p137 = scmp.ne.s32.totalorder %s120, %s136
      %p138 = scmp.eq.s32.totalorder %s35, 0
      %p139 = por %p137, %p138
      %s140 = ssub.s32 %s36, %s55
      %s141 = ssub.s32 %s38, %s47
      %s142 = sor.u32 %s140, %s141
      %p143 = scmp.eq.s32.totalorder %s142, 0
      %s145 = sadd.s32 %s144, 1
      %s146 = scalar_select %p143, %s144, %s145
      %p149 = pneg %p143
      %p150 = scmp.eq.s32.totalorder %s29, 1
      %p151 = por %p149, %p150
      %p152 = scmp.ne.s32.totalorder %s144, %s147
      %p153 = scmp.eq.s32.totalorder %s29, 0
      %p154 = por %p152, %p153
      %p155 = scmp.ne.s32.totalorder %s144, %s147
      %p156 = scmp.eq.s32.totalorder %s34, 1
      %p157 = por %p155, %p156
      %p158 = scmp.ne.s32.totalorder %s147, %s148
      %p159 = scmp.eq.s32.totalorder %s34, 0
      %p160 = por %p158, %p159
      %p161 = scmp.ne.s32.totalorder %s147, %s148
      %p162 = scmp.eq.s32.totalorder %s35, 1
      %p163 = por %p161, %p162
      %p165 = scmp.ne.s32.totalorder %s148, %s164
      %p166 = scmp.eq.s32.totalorder %s35, 0
      %p167 = por %p165, %p166
      %s169 = sadd.s32 %s168, 1
      %p172 = scmp.eq.s32.totalorder %s29, 1
      %p173 = scmp.ne.s32.totalorder %s168, %s170
      %p174 = scmp.eq.s32.totalorder %s29, 0
      %p175 = por %p173, %p174
      %p176 = scmp.ne.s32.totalorder %s168, %s170
      %p177 = scmp.eq.s32.totalorder %s34, 1
      %p178 = por %p176, %p177
      %p179 = scmp.ne.s32.totalorder %s170, %s171
      %p180 = scmp.eq.s32.totalorder %s34, 0
      %p181 = por %p179, %p180
      %p182 = scmp.ne.s32.totalorder %s170, %s171
      %p183 = scmp.eq.s32.totalorder %s35, 1
      %p184 = por %p182, %p183
      %p186 = scmp.ne.s32.totalorder %s171, %s185
      %p187 = scmp.eq.s32.totalorder %s35, 0
      %p188 = por %p186, %p187
      %s190 = sadd.s32 %s189, 1
      %p193 = scmp.eq.s32.totalorder %s29, 1
      %p194 = scmp.ne.s32.totalorder %s189, %s191
      %p195 = scmp.eq.s32.totalorder %s29, 0
      %p196 = por %p194, %p195
      %p197 = scmp.ne.s32.totalorder %s189, %s191
      %p198 = scmp.eq.s32.totalorder %s34, 1
      %p199 = por %p197, %p198
      %p200 = scmp.ne.s32.totalorder %s191, %s192
      %p201 = scmp.eq.s32.totalorder %s34, 0
      %p202 = por %p200, %p201
      %p203 = scmp.ne.s32.totalorder %s191, %s192
      %p204 = scmp.eq.s32.totalorder %s35, 1
      %p205 = por %p203, %p204
      %p207 = scmp.ne.s32.totalorder %s192, %s206
      %p208 = scmp.eq.s32.totalorder %s35, 0
      %p209 = por %p207, %p208
      %s211 = sadd.s32 %s210, 1
      %p214 = scmp.eq.s32.totalorder %s29, 1
      %p215 = scmp.ne.s32.totalorder %s210, %s212
      %p216 = scmp.eq.s32.totalorder %s29, 0
      %p217 = por %p215, %p216
      %p218 = scmp.ne.s32.totalorder %s210, %s212
      %p219 = scmp.eq.s32.totalorder %s34, 1
      %p220 = por %p218, %p219
      %p221 = scmp.ne.s32.totalorder %s212, %s213
      %p222 = scmp.eq.s32.totalorder %s34, 0
      %p223 = por %p221, %p222
      %p224 = scmp.ne.s32.totalorder %s212, %s213
      %p225 = scmp.eq.s32.totalorder %s35, 1
      %p226 = por %p224, %p225
      %p228 = scmp.ne.s32.totalorder %s213, %s227
      %p229 = scmp.eq.s32.totalorder %s35, 0
      %p230 = por %p228, %p229
      %s232 = sadd.s32 %s231, 1
      %p235 = scmp.eq.s32.totalorder %s29, 1
      %p236 = scmp.ne.s32.totalorder %s231, %s233
      %p237 = scmp.eq.s32.totalorder %s29, 0
      %p238 = por %p236, %p237
      %p239 = scmp.ne.s32.totalorder %s231, %s233
      %p240 = scmp.eq.s32.totalorder %s34, 1
      %p241 = por %p239, %p240
      %p242 = scmp.ne.s32.totalorder %s233, %s234
      %p243 = scmp.eq.s32.totalorder %s34, 0
      %p244 = por %p242, %p243
      %p245 = scmp.ne.s32.totalorder %s233, %s234
      %p246 = scmp.eq.s32.totalorder %s35, 1
      %p247 = por %p245, %p246
      %p249 = scmp.ne.s32.totalorder %s234, %s248
      %p250 = scmp.eq.s32.totalorder %s35, 0
      %p251 = por %p249, %p250
      %s253 = sadd.s32 %s252, 1
      %p256 = scmp.eq.s32.totalorder %s29, 1
      %p257 = scmp.ne.s32.totalorder %s252, %s254
      %p258 = scmp.eq.s32.totalorder %s29, 0
      %p259 = por %p257, %p258
      %p260 = scmp.ne.s32.totalorder %s252, %s254
      %p261 = scmp.eq.s32.totalorder %s34, 1
      %p262 = por %p260, %p261
      %p263 = scmp.ne.s32.totalorder %s254, %s255
      %p264 = scmp.eq.s32.totalorder %s34, 0
      %p265 = por %p263, %p264
      %p266 = scmp.ne.s32.totalorder %s254, %s255
      %p267 = scmp.eq.s32.totalorder %s35, 1
      %p268 = por %p266, %p267
      %p270 = scmp.ne.s32.totalorder %s255, %s269
      %p271 = scmp.eq.s32.totalorder %s35, 0
      %p272 = por %p270, %p271
      %s274 = sadd.s32 %s273, 1
      %p277 = scmp.eq.s32.totalorder %s29, 1
      %p278 = scmp.ne.s32.totalorder %s273, %s275
      %p279 = scmp.eq.s32.totalorder %s29, 0
      %p280 = por %p278, %p279
      %p281 = scmp.ne.s32.totalorder %s273, %s275
      %p282 = scmp.eq.s32.totalorder %s34, 1
      %p283 = por %p281, %p282
      %p284 = scmp.ne.s32.totalorder %s275, %s276
      %p285 = scmp.eq.s32.totalorder %s34, 0
      %p286 = por %p284, %p285
      %p287 = scmp.ne.s32.totalorder %s275, %s276
      %p288 = scmp.eq.s32.totalorder %s35, 1
      %p289 = por %p287, %p288
      %p291 = scmp.ne.s32.totalorder %s276, %s290
      %p292 = scmp.eq.s32.totalorder %s35, 0
      %p293 = por %p291, %p292
      %s295 = sadd.s32 %s294, 1
      %p298 = scmp.eq.s32.totalorder %s29, 1
      %p299 = scmp.ne.s32.totalorder %s294, %s296
      %p300 = scmp.eq.s32.totalorder %s29, 0
      %p301 = por %p299, %p300
      %p302 = scmp.ne.s32.totalorder %s294, %s296
      %p303 = scmp.eq.s32.totalorder %s34, 1
      %p304 = por %p302, %p303
      %p305 = scmp.ne.s32.totalorder %s296, %s297
      %p306 = scmp.eq.s32.totalorder %s34, 0
      %p307 = por %p305, %p306
      %p308 = scmp.ne.s32.totalorder %s296, %s297
      %p309 = scmp.eq.s32.totalorder %s35, 1
      %p310 = por %p308, %p309
      %p312 = scmp.ne.s32.totalorder %s297, %s311
      %p313 = scmp.eq.s32.totalorder %s35, 0
      %p314 = por %p312, %p313
      %s316 = sadd.s32 %s315, 1
      %p319 = scmp.eq.s32.totalorder %s29, 1
      %p320 = scmp.ne.s32.totalorder %s315, %s317
      %p321 = scmp.eq.s32.totalorder %s29, 0
      %p322 = por %p320, %p321
      %p323 = scmp.ne.s32.totalorder %s315, %s317
      %p324 = scmp.eq.s32.totalorder %s34, 1
      %p325 = por %p323, %p324
      %p326 = scmp.ne.s32.totalorder %s317, %s318
      %p327 = scmp.eq.s32.totalorder %s34, 0
      %p328 = por %p326, %p327
      %p329 = scmp.ne.s32.totalorder %s317, %s318
      %p330 = scmp.eq.s32.totalorder %s35, 1
      %p331 = por %p329, %p330
      %p333 = scmp.ne.s32.totalorder %s318, %s332
      %p334 = scmp.eq.s32.totalorder %s35, 0
      %p335 = por %p333, %p334
      %s337 = sadd.s32 %s336, 1
      %p340 = scmp.eq.s32.totalorder %s29, 1
      %p341 = scmp.ne.s32.totalorder %s336, %s338
      %p342 = scmp.eq.s32.totalorder %s29, 0
      %p343 = por %p341, %p342
      %p344 = scmp.ne.s32.totalorder %s336, %s338
      %p345 = scmp.eq.s32.totalorder %s34, 1
      %p346 = por %p344, %p345
      %p347 = scmp.ne.s32.totalorder %s338, %s339
      %p348 = scmp.eq.s32.totalorder %s34, 0
      %p349 = por %p347, %p348
      %p350 = scmp.ne.s32.totalorder %s338, %s339
      %p351 = scmp.eq.s32.totalorder %s35, 1
      %p352 = por %p350, %p351
      %p354 = scmp.ne.s32.totalorder %s339, %s353
      %p355 = scmp.eq.s32.totalorder %s35, 0
      %p356 = por %p354, %p355
      %s358 = sadd.s32 %s357, 1
      %p361 = scmp.eq.s32.totalorder %s29, 1
      %p362 = scmp.ne.s32.totalorder %s357, %s359
      %p363 = scmp.eq.s32.totalorder %s29, 0
      %p364 = por %p362, %p363
      %p365 = scmp.ne.s32.totalorder %s357, %s359
      %p366 = scmp.eq.s32.totalorder %s34, 1
      %p367 = por %p365, %p366
      %p368 = scmp.ne.s32.totalorder %s359, %s360
      %p369 = scmp.eq.s32.totalorder %s34, 0
      %p370 = por %p368, %p369
      %p371 = scmp.ne.s32.totalorder %s359, %s360
      %p372 = scmp.eq.s32.totalorder %s35, 1
      %p373 = por %p371, %p372
      %p375 = scmp.ne.s32.totalorder %s360, %s374
      %p376 = scmp.eq.s32.totalorder %s35, 0
      %p377 = por %p375, %p376
      %s379 = sadd.s32 %s378, 1
      %p382 = scmp.eq.s32.totalorder %s29, 1
      %p383 = scmp.ne.s32.totalorder %s378, %s380
      %p384 = scmp.eq.s32.totalorder %s29, 0
      %p385 = por %p383, %p384
      %p386 = scmp.ne.s32.totalorder %s378, %s380
      %p387 = scmp.eq.s32.totalorder %s34, 1
      %p388 = por %p386, %p387
      %p389 = scmp.ne.s32.totalorder %s380, %s381
      %p390 = scmp.eq.s32.totalorder %s34, 0
      %p391 = por %p389, %p390
      %p392 = scmp.ne.s32.totalorder %s380, %s381
      %p393 = scmp.eq.s32.totalorder %s35, 1
      %p394 = por %p392, %p393
      %p396 = scmp.ne.s32.totalorder %s381, %s395
      %p397 = scmp.eq.s32.totalorder %s35, 0
      %p398 = por %p396, %p397
      %s400 = sadd.s32 %s399, 1
      %p403 = scmp.eq.s32.totalorder %s29, 1
      %p404 = scmp.ne.s32.totalorder %s399, %s401
      %p405 = scmp.eq.s32.totalorder %s29, 0
      %p406 = por %p404, %p405
      %p407 = scmp.ne.s32.totalorder %s399, %s401
      %p408 = scmp.eq.s32.totalorder %s34, 1
      %p409 = por %p407, %p408
      %p410 = scmp.ne.s32.totalorder %s401, %s402
      %p411 = scmp.eq.s32.totalorder %s34, 0
      %p412 = por %p410, %p411
      %p413 = scmp.ne.s32.totalorder %s401, %s402
      %p414 = scmp.eq.s32.totalorder %s35, 1
      %p415 = por %p413, %p414
      %p417 = scmp.ne.s32.totalorder %s402, %s416
      %p418 = scmp.eq.s32.totalorder %s35, 0
      %p419 = por %p417, %p418
      %s421 = sadd.s32 %s420, 1
      %p424 = scmp.eq.s32.totalorder %s29, 1
      %p425 = scmp.ne.s32.totalorder %s420, %s422
      %p426 = scmp.eq.s32.totalorder %s29, 0
      %p427 = por %p425, %p426
      %p428 = scmp.ne.s32.totalorder %s420, %s422
      %p429 = scmp.eq.s32.totalorder %s34, 1
      %p430 = por %p428, %p429
      %p431 = scmp.ne.s32.totalorder %s422, %s423
      %p432 = scmp.eq.s32.totalorder %s34, 0
      %p433 = por %p431, %p432
      %p434 = scmp.ne.s32.totalorder %s422, %s423
      %p435 = scmp.eq.s32.totalorder %s35, 1
      %p436 = por %p434, %p435
      %p438 = scmp.ne.s32.totalorder %s423, %s437
      %p439 = scmp.eq.s32.totalorder %s35, 0
      %p440 = por %p438, %p439
      %s442 = sadd.s32 %s441, 1
      %p445 = scmp.eq.s32.totalorder %s29, 1
      %p446 = scmp.ne.s32.totalorder %s441, %s443
      %p447 = scmp.eq.s32.totalorder %s29, 0
      %p448 = por %p446, %p447
      %p449 = scmp.ne.s32.totalorder %s441, %s443
      %p450 = scmp.eq.s32.totalorder %s34, 1
      %p451 = por %p449, %p450
      %p452 = scmp.ne.s32.totalorder %s443, %s444
      %p453 = scmp.eq.s32.totalorder %s34, 0
      %p454 = por %p452, %p453
      %p455 = scmp.ne.s32.totalorder %s443, %s444
      %p456 = scmp.eq.s32.totalorder %s35, 1
      %p457 = por %p455, %p456
      %p459 = scmp.ne.s32.totalorder %s444, %s458
      %p460 = scmp.eq.s32.totalorder %s35, 0
      %p461 = por %p459, %p460
      %s463 = sadd.s32 %s462, 1
      %p466 = scmp.eq.s32.totalorder %s29, 1
      %p467 = scmp.ne.s32.totalorder %s462, %s464
      %p468 = scmp.eq.s32.totalorder %s29, 0
      %p469 = por %p467, %p468
      %p470 = scmp.ne.s32.totalorder %s462, %s464
      %p471 = scmp.eq.s32.totalorder %s34, 1
      %p472 = por %p470, %p471
      %p473 = scmp.ne.s32.totalorder %s464, %s465
      %p474 = scmp.eq.s32.totalorder %s34, 0
      %p475 = por %p473, %p474
      %p476 = scmp.ne.s32.totalorder %s464, %s465
      %p477 = scmp.eq.s32.totalorder %s35, 1
      %p478 = por %p476, %p477
      %p480 = scmp.ne.s32.totalorder %s465, %s479
      %p481 = scmp.eq.s32.totalorder %s35, 0
      %p482 = por %p480, %p481
      %s483 = ssub.s32 %s36, %s55
      %s484 = ssub.s32 %s37, %s51
      %s485 = sor.u32 %s483, %s484
      %p486 = scmp.eq.s32.totalorder %s485, 0
      %s488 = sadd.s32 %s487, 1
      %s489 = scalar_select %p486, %s487, %s488
      %p492 = pneg %p486
      %p493 = scmp.eq.s32.totalorder %s29, 1
      %p494 = por %p492, %p493
      %p495 = scmp.ne.s32.totalorder %s487, %s490
      %p496 = scmp.eq.s32.totalorder %s29, 0
      %p497 = por %p495, %p496
      %p498 = scmp.ne.s32.totalorder %s487, %s490
      %p499 = scmp.eq.s32.totalorder %s34, 1
      %p500 = por %p498, %p499
      %p501 = scmp.ne.s32.totalorder %s490, %s491
      %p502 = scmp.eq.s32.totalorder %s34, 0
      %p503 = por %p501, %p502
      %p504 = scmp.ne.s32.totalorder %s490, %s491
      %p505 = scmp.eq.s32.totalorder %s35, 1
      %p506 = por %p504, %p505
      %p508 = scmp.ne.s32.totalorder %s491, %s507
      %p509 = scmp.eq.s32.totalorder %s35, 0
      %p510 = por %p508, %p509
      %p511 = scmp.le.s32.totalorder 1, %s29
      %p512 = scmp.lt.s32.totalorder %s29, 3
      %p513 = pnand %p511, %p512
      %p514 = pneg %p513
      // Predicated region
      $region9: #{tpu_custom_call.1} parent=5 // pred_check
        _
      $region10: #{tpu_custom_call.1} parent=5 // pred_check_branch
        %516 = sbr.rel (%p513) target = $region12
      $region11: #{tpu_custom_call.1} parent=5 // pred_region
        %s517 = ssub.s32 %s29, 1
        // Predicated region
        $region13: #{tpu_custom_call.1} parent=11 // pred_check
          %p518 = pneg %p181
        $region14: #{tpu_custom_call.1} parent=11 // pred_check_branch
          %520 = sbr.rel (%p518) target = $region16
        $region15: #{tpu_custom_call.1} parent=11 // pred_region
          _
        $region16: #{tpu_custom_call.1} parent=11 // pred_fallthru
          _
        // Predicated region
        $region17: #{tpu_custom_call.1} parent=11 // pred_check
          %p521 = pneg %p202
        $region18: #{tpu_custom_call.1} parent=11 // pred_check_branch
          %523 = sbr.rel (%p521) target = $region20
        $region19: #{tpu_custom_call.1} parent=11 // pred_region
          _
        $region20: #{tpu_custom_call.1} parent=11 // pred_fallthru
          _
        // Predicated region
        $region21: #{tpu_custom_call.1} parent=11 // pred_check
          %p524 = pneg %p223
        $region22: #{tpu_custom_call.1} parent=11 // pred_check_branch
          %526 = sbr.rel (%p524) target = $region24
        $region23: #{tpu_custom_call.1} parent=11 // pred_region
          _
        $region24: #{tpu_custom_call.1} parent=11 // pred_fallthru
          _
        // Predicated region
        $region25: #{tpu_custom_call.1} parent=11 // pred_check
          %p527 = pneg %p244
        $region26: #{tpu_custom_call.1} parent=11 // pred_check_branch
          %529 = sbr.rel (%p527) target = $region28
        $region27: #{tpu_custom_call.1} parent=11 // pred_region
          _
        $region28: #{tpu_custom_call.1} parent=11 // pred_fallthru
          _
        // Predicated region
        $region29: #{tpu_custom_call.1} parent=11 // pred_check
          %p530 = pneg %p265
        $region30: #{tpu_custom_call.1} parent=11 // pred_check_branch
          %532 = sbr.rel (%p530) target = $region32
        $region31: #{tpu_custom_call.1} parent=11 // pred_region
          _
        $region32: #{tpu_custom_call.1} parent=11 // pred_fallthru
          _
        // Predicated region
        $region33: #{tpu_custom_call.1} parent=11 // pred_check
          %p533 = pneg %p286
        $region34: #{tpu_custom_call.1} parent=11 // pred_check_branch
          %535 = sbr.rel (%p533) target = $region36
        $region35: #{tpu_custom_call.1} parent=11 // pred_region
          _
        $region36: #{tpu_custom_call.1} parent=11 // pred_fallthru
          _
        // Predicated region
        $region37: #{tpu_custom_call.1} parent=11 // pred_check
          %p536 = pneg %p307
        $region38: #{tpu_custom_call.1} parent=11 // pred_check_branch
          %538 = sbr.rel (%p536) target = $region40
        $region39: #{tpu_custom_call.1} parent=11 // pred_region
          _
        $region40: #{tpu_custom_call.1} parent=11 // pred_fallthru
          _
        // Predicated region
        $region41: #{tpu_custom_call.1} parent=11 // pred_check
          %p539 = pneg %p328
        $region42: #{tpu_custom_call.1} parent=11 // pred_check_branch
          %541 = sbr.rel (%p539) target = $region44
        $region43: #{tpu_custom_call.1} parent=11 // pred_region
          _
        $region44: #{tpu_custom_call.1} parent=11 // pred_fallthru
          _
        // Predicated region
        $region45: #{tpu_custom_call.1} parent=11 // pred_check
          %p542 = pneg %p349
        $region46: #{tpu_custom_call.1} parent=11 // pred_check_branch
          %544 = sbr.rel (%p542) target = $region48
        $region47: #{tpu_custom_call.1} parent=11 // pred_region
          _
        $region48: #{tpu_custom_call.1} parent=11 // pred_fallthru
          _
        // Predicated region
        $region49: #{tpu_custom_call.1} parent=11 // pred_check
          %p545 = pneg %p370
        $region50: #{tpu_custom_call.1} parent=11 // pred_check_branch
          %547 = sbr.rel (%p545) target = $region52
        $region51: #{tpu_custom_call.1} parent=11 // pred_region
          _
        $region52: #{tpu_custom_call.1} parent=11 // pred_fallthru
          _
        // Predicated region
        $region53: #{tpu_custom_call.1} parent=11 // pred_check
          %p548 = pneg %p391
        $region54: #{tpu_custom_call.1} parent=11 // pred_check_branch
          %550 = sbr.rel (%p548) target = $region56
        $region55: #{tpu_custom_call.1} parent=11 // pred_region
          _
        $region56: #{tpu_custom_call.1} parent=11 // pred_fallthru
          _
        // Predicated region
        $region57: #{tpu_custom_call.1} parent=11 // pred_check
          %p551 = pneg %p412
        $region58: #{tpu_custom_call.1} parent=11 // pred_check_branch
          %553 = sbr.rel (%p551) target = $region60
        $region59: #{tpu_custom_call.1} parent=11 // pred_region
          _
        $region60: #{tpu_custom_call.1} parent=11 // pred_fallthru
          _
        // Predicated region
        $region61: #{tpu_custom_call.1} parent=11 // pred_check
          %p554 = pneg %p433
        $region62: #{tpu_custom_call.1} parent=11 // pred_check_branch
          %556 = sbr.rel (%p554) target = $region64
        $region63: #{tpu_custom_call.1} parent=11 // pred_region
          _
        $region64: #{tpu_custom_call.1} parent=11 // pred_fallthru
          _
        // Predicated region
        $region65: #{tpu_custom_call.1} parent=11 // pred_check
          %p557 = pneg %p454
        $region66: #{tpu_custom_call.1} parent=11 // pred_check_branch
          %559 = sbr.rel (%p557) target = $region68
        $region67: #{tpu_custom_call.1} parent=11 // pred_region
          _
        $region68: #{tpu_custom_call.1} parent=11 // pred_fallthru
          _
        // Predicated region
        $region69: #{tpu_custom_call.1} parent=11 // pred_check
          %p560 = pneg %p475
        $region70: #{tpu_custom_call.1} parent=11 // pred_check_branch
          %562 = sbr.rel (%p560) target = $region72
        $region71: #{tpu_custom_call.1} parent=11 // pred_region
          _
        $region72: #{tpu_custom_call.1} parent=11 // pred_fallthru
          _
      $region12: #{tpu_custom_call.1} parent=5 // pred_fallthru
        _
      %p563 = scmp.lt.s32.totalorder %s29, 2
      // Predicated region
      $region73: #{tpu_custom_call.1} parent=5 // pred_check
        %p564 = pneg %p563
      $region74: #{tpu_custom_call.1} parent=5 // pred_check_branch
        %566 = sbr.rel (%p564) target = $region76
      $region75: #{tpu_custom_call.1} parent=5 // pred_region
        // Predicated region
        $region77: #{tpu_custom_call.1} parent=75 // pred_check
          %p567 = pneg %p70
        $region78: #{tpu_custom_call.1} parent=75 // pred_check_branch
          %569 = sbr.rel (%p567) target = $region80
        $region79: #{tpu_custom_call.1} parent=75 // pred_region
          %p570 = scmp.lt.s32.totalorder %s36, 1
          %s571 = scalar_select %p570, %s36, 1
          %p572 = scmp.lt.s32.totalorder %s37, 0
          %s573 = scalar_select %p572, %s37, 0
          %s574 = sadd.s32 %s573, %s571
          %s575 = smul.addr %s574, 8
          %s576 = scalar_lea.vmem %s0, %s575
        $region80: #{tpu_custom_call.1} parent=75 // pred_fallthru
          _
        // Predicated region
        $region81: #{tpu_custom_call.1} parent=75 // pred_check
          %p577 = pneg %p98
        $region82: #{tpu_custom_call.1} parent=75 // pred_check_branch
          %579 = sbr.rel (%p577) target = $region84
        $region83: #{tpu_custom_call.1} parent=75 // pred_region
          %p580 = scmp.lt.s32.totalorder %s36, 1
          %s581 = scalar_select %p580, %s36, 1
          %p582 = scmp.lt.s32.totalorder %s37, 0
          %s583 = scalar_select %p582, %s37, 0
          %s584 = sadd.s32 %s583, %s581
          %s585 = smul.addr %s584, 8
          %s586 = scalar_lea.vmem %s1, %s585
        $region84: #{tpu_custom_call.1} parent=75 // pred_fallthru
          _
        // Predicated region
        $region85: #{tpu_custom_call.1} parent=75 // pred_check
          %p587 = pneg %p126
        $region86: #{tpu_custom_call.1} parent=75 // pred_check_branch
          %589 = sbr.rel (%p587) target = $region88
        $region87: #{tpu_custom_call.1} parent=75 // pred_region
          %p590 = scmp.lt.s32.totalorder %s36, 1
          %s591 = scalar_select %p590, %s36, 1
          %p592 = scmp.lt.s32.totalorder %s38, 0
          %s593 = scalar_select %p592, %s38, 0
          %s594 = sadd.s32 %s593, %s591
          %s595 = smul.addr %s594, 8
          %s596 = scalar_lea.vmem %s2, %s595
        $region88: #{tpu_custom_call.1} parent=75 // pred_fallthru
          _
        // Predicated region
        $region89: #{tpu_custom_call.1} parent=75 // pred_check
          %p597 = pneg %p154
        $region90: #{tpu_custom_call.1} parent=75 // pred_check_branch
          %599 = sbr.rel (%p597) target = $region92
        $region91: #{tpu_custom_call.1} parent=75 // pred_region
          %p600 = scmp.lt.s32.totalorder %s36, 1
          %s601 = scalar_select %p600, %s36, 1
          %p602 = scmp.lt.s32.totalorder %s38, 0
          %s603 = scalar_select %p602, %s38, 0
          %s604 = sadd.s32 %s603, %s601
          %s605 = smul.addr %s604, 8
          %s606 = scalar_lea.vmem %s3, %s605
        $region92: #{tpu_custom_call.1} parent=75 // pred_fallthru
          _
      $region76: #{tpu_custom_call.1} parent=5 // pred_fallthru
        _
      %p607 = scmp.le.s32.totalorder 1, %s29
      %p608 = scmp.lt.s32.totalorder %s29, 3
      %p609 = pnand %p607, %p608
      %p610 = pneg %p609
      // Predicated region
      $region93: #{tpu_custom_call.1} parent=5 // pred_check
        _
      $region94: #{tpu_custom_call.1} parent=5 // pred_check_branch
        %612 = sbr.rel (%p609) target = $region96
      $region95: #{tpu_custom_call.1} parent=5 // pred_region
        %s613 = ssub.s32 %s29, 1
        %p614 = scmp.lt.s32.totalorder %s39, 1
        %s615 = scalar_select %p614, %s39, 1
        %p616 = scmp.lt.s32.totalorder %s40, 0
        %s617 = scalar_select %p616, %s40, 0
        %s618 = sadd.s32 %s617, %s615
        %s619 = smul.addr %s618, 8
        %s620 = scalar_lea.vmem %s0, %s619
        %p621 = pneg %p76
        %p622 = pneg %p73
        %p623 = scmp.lt.s32.totalorder %s39, 1
        %s624 = scalar_select %p623, %s39, 1
        %p625 = scmp.lt.s32.totalorder %s40, 0
        %s626 = scalar_select %p625, %s40, 0
        %s627 = sadd.s32 %s626, %s624
        %s628 = smul.addr %s627, 8
        %s629 = scalar_lea.vmem %s1, %s628
        %p630 = pneg %p104
        %p631 = pneg %p101
        %p632 = scmp.lt.s32.totalorder %s39, 1
        %s633 = scalar_select %p632, %s39, 1
        %p634 = scmp.lt.s32.totalorder %s41, 0
        %s635 = scalar_select %p634, %s41, 0
        %s636 = sadd.s32 %s635, %s633
        %s637 = smul.addr %s636, 8
        %s638 = scalar_lea.vmem %s2, %s637
        %p639 = pneg %p132
        %p640 = pneg %p129
        %p641 = scmp.lt.s32.totalorder %s39, 1
        %s642 = scalar_select %p641, %s39, 1
        %p643 = scmp.lt.s32.totalorder %s41, 0
        %s644 = scalar_select %p643, %s41, 0
        %s645 = sadd.s32 %s644, %s642
        %s646 = smul.addr %s645, 8
        %s647 = scalar_lea.vmem %s3, %s646
        %p648 = pneg %p160
        %p649 = pneg %p157
        %p650 = pneg %p181
        %p651 = pneg %p178
        %p652 = pneg %p202
        %p653 = pneg %p199
        %p654 = pneg %p223
        %p655 = pneg %p220
        %p656 = pneg %p244
        %p657 = pneg %p241
        %p658 = pneg %p265
        %p659 = pneg %p262
        %p660 = pneg %p286
        %p661 = pneg %p283
        %p662 = pneg %p307
        %p663 = pneg %p304
        %p664 = pneg %p328
        %p665 = pneg %p325
        %p666 = pneg %p349
        %p667 = pneg %p346
        %p668 = pneg %p370
        %p669 = pneg %p367
        %p670 = pneg %p391
        %p671 = pneg %p388
        %p672 = pneg %p412
        %p673 = pneg %p409
        %p674 = pneg %p433
        %p675 = pneg %p430
        %p676 = pneg %p454
        %p677 = pneg %p451
        %p678 = pneg %p475
        %p679 = pneg %p472
        %p680 = pneg %p503
        %p681 = pneg %p500
        %s682 = sand.u32 %s490, 1
        %s683 = scalar_lea.sflag [#allocation7], %s682
        %s684 = sand.u32 %s490, 1
        %s685 = smul.addr %s684, 8
        %s686 = scalar_lea.vmem [#allocation6], %s685
        %p687 = scmp.lt.s32.totalorder %s39, 1
        %s688 = scalar_select %p687, %s39, 1
        %p689 = scmp.lt.s32.totalorder %s40, 0
        %s690 = scalar_select %p689, %s40, 0
        %s691 = sadd.s32 %s690, %s688
        %s692 = smul.addr %s691, 8
        %s693 = scalar_lea.vmem %s0, %s692
        %p694 = scmp.lt.s32.totalorder %s39, 1
        %s695 = scalar_select %p694, %s39, 1
        %p696 = scmp.lt.s32.totalorder %s40, 0
        %s697 = scalar_select %p696, %s40, 0
        %s698 = sadd.s32 %s697, %s695
        %s699 = smul.addr %s698, 8
        %s700 = scalar_lea.vmem %s1, %s699
        %p701 = scmp.lt.s32.totalorder %s39, 1
        %s702 = scalar_select %p701, %s39, 1
        %p703 = scmp.lt.s32.totalorder %s41, 0
        %s704 = scalar_select %p703, %s41, 0
        %s705 = sadd.s32 %s704, %s702
        %s706 = smul.addr %s705, 8
        %s707 = scalar_lea.vmem %s2, %s706
        %p708 = scmp.lt.s32.totalorder %s39, 1
        %s709 = scalar_select %p708, %s39, 1
        %p710 = scmp.lt.s32.totalorder %s41, 0
        %s711 = scalar_select %p710, %s41, 0
        %s712 = sadd.s32 %s711, %s709
        %s713 = smul.addr %s712, 8
        %s714 = scalar_lea.vmem %s3, %s713
        %v715 = vld [vmem:[%s693] sm:$0xff]
        %v716 = vld [vmem:[%s700] sm:$0xff]
        %v717 = vld [vmem:[%s707] sm:$0xff]
        %v718 = vld [vmem:[%s714] sm:$0xff]
        %p719 = scmp.eq.s32.totalorder %s41, 0
        // Predicated region
        $region97: #{tpu_custom_call.1} parent=95 // pred_check
          %p720 = pneg %p719
        $region98: #{tpu_custom_call.1} parent=95 // pred_check_branch
          %722 = sbr.rel (%p720) target = $region100
        $region99: #{tpu_custom_call.1} parent=95 // pred_region
          %vm723 = vcmask 130048
          %724 = vst.msk [vmem:[#allocation2] sm:$0xff] %vm723, 0.0
          %vm725 = vcmask 23552
          %726 = vst.msk [vmem:[#allocation3] sm:$0xff] %vm725, 0.0
          %v727 = vld [vmem:[%s4] sm:$0xff]
          %v728 = vld [vmem:[%s4 + $0x8] sm:$0xff]
          %v729 = vld [vmem:[%s4 + $0x10] sm:$0xff]
          %v730 = vld [vmem:[%s4 + $0x18] sm:$0xff]
          %v731 = vld [vmem:[%s4 + $0x20] sm:$0xff]
          %v732 = vld [vmem:[%s4 + $0x28] sm:$0xff]
          %v733 = vld [vmem:[%s4 + $0x30] sm:$0xff]
          %v734 = vld [vmem:[%s4 + $0x38] sm:$0xff]
          %v735 = vld [vmem:[%s7] sm:$0x3]
          %v737 = vlaneseq
          %v738 = vshrl.u32 %v737, 7
          %v739 = vsub.s32 0, %v738
          %v740 = vrot.slane %v735, %v739
          %v741 = vlaneseq
          %v742 = vshrl.u32 %v741, 7
          %v743 = vsub.s32 1, %v742
          %v744 = vrot.slane %v735, %v743
          %vm747 = vcmask 261120
          %v749 = vsel %vm747, %v715, 0
          %751 = vmatprep.subr.mxu0 %v728
          %752 = vmatpush1.msra.mxu0 %v727
          %753 = vmatprep.subr.mxu0 %v730
          %754 = vmatpush1.msra.mxu0 %v729
          %755 = vmatprep.subr.mxu0 %v732
          %756 = vmatpush1.msra.mxu0 %v731
          %757 = vmatprep.subr.mxu0 %v734
          %758 = vmatpush1.msra.mxu0 %v733
          %759 = vmatprep.subr.mxu0 0.0
          %760 = vmatpush1.msra.mxu0 0.0
          %761 = vmatprep.subr.mxu0 0.0
          %762 = vmatpush1.msra.mxu0 0.0
          %763 = vmatprep.subr.mxu0 0.0
          %764 = vmatpush1.msra.mxu0 0.0
          %765 = vmatprep.subr.mxu0 0.0
          %766 = vmatpush1.msra.mxu0 0.0
          %767 = vmatprep.subr.mxu0 0.0
          %768 = vmatpush1.msra.mxu0 0.0
          %769 = vmatprep.subr.mxu0 0.0
          %770 = vmatpush1.msra.mxu0 0.0
          %771 = vmatprep.subr.mxu0 0.0
          %772 = vmatpush1.msra.mxu0 0.0
          %773 = vmatprep.subr.mxu0 0.0
          %774 = vmatpush1.msra.mxu0 0.0
          %775 = vmatprep.subr.mxu0 0.0
          %776 = vmatpush1.msra.mxu0 0.0
          %777 = vmatprep.subr.mxu0 0.0
          %778 = vmatpush1.msra.mxu0 0.0
          %779 = vmatprep.subr.mxu0 0.0
          %780 = vmatpush1.msra.mxu0 0.0
          %781 = vmatprep.subr.mxu0 0.0
          %782 = vmatpush1.msra.mxu0 0.0
          %783 = vmatprep.subr.mxu0 0.0
          %784 = vmatpush1.msra.mxu0 0.0
          %785 = vmatprep.subr.mxu0 0.0
          %786 = vmatpush1.msra.mxu0 0.0
          %787 = vmatprep.subr.mxu0 0.0
          %788 = vmatpush1.msra.mxu0 0.0
          %789 = vmatprep.subr.mxu0 0.0
          %790 = vmatpush1.msra.mxu0 0.0
          %791 = vmatprep.subr.mxu0 0.0
          %792 = vmatpush1.msra.mxu0 0.0
          %793 = vmatprep.subr.mxu0 0.0
          %794 = vmatpush1.msra.mxu0 0.0
          %795 = vmatprep.subr.mxu0 0.0
          %796 = vmatpush1.msra.mxu0 0.0
          %797 = vmatprep.subr.mxu0 0.0
          %798 = vmatpush1.msra.mxu0 0.0
          %799 = vmatprep.subr.mxu0 0.0
          %800 = vmatpush1.msra.mxu0 0.0
          %801 = vmatprep.subr.mxu0 0.0
          %802 = vmatpush1.msra.mxu0 0.0
          %803 = vmatprep.subr.mxu0 0.0
          %804 = vmatpush1.msra.mxu0 0.0
          %805 = vmatprep.subr.mxu0 0.0
          %806 = vmatpush1.msra.mxu0 0.0
          %807 = vmatprep.subr.mxu0 0.0
          %808 = vmatpush1.msra.mxu0 0.0
          %809 = vmatprep.subr.mxu0 0.0
          %810 = vmatpush1.msra.mxu0 0.0
          %811 = vmatprep.subr.mxu0 0.0
          %812 = vmatpush1.msra.mxu0 0.0
          %813 = vmatprep.subr.mxu0 0.0
          %814 = vmatpush1.msra.mxu0 0.0
          %815 = vmatprep.mubr.f32.mxu0 0.0
          %816 = vmatmul.mubr.f32.gmra.mrb[0].mxu0 %v749
          %v817 = vpop.f32.mrb[0].mxu0
          %v818 = vadd.f32 %v740, %v817
          %v819 = vpop.f32.mrb[0].mxu0
          %v820 = vadd.f32 %v744, %v819
          %821 = vdwg.mxu0
          %822 = vst [vmem:[#allocation4] sm:$0xff] %v818
          %vm823 = vcmask 15360
          %824 = vst.msk [vmem:[#allocation4 + $0x8] sm:$0xff] %vm823, %v820
        $region100: #{tpu_custom_call.1} parent=95 // pred_fallthru
          _
        %vm825 = vcmask 23552
        %v826 = vsel %vm825, %v718, 0.0
        %v827 = vrot.slane %v826, 4
        %v828 = vadd.f32 %v826, %v827
        %v829 = vrot.slane %v828, 2
        %v830 = vadd.f32 %v828, %v829
        %v831 = vrot.slane %v830, 1
        %v832 = vadd.f32 %v830, %v831
        %v833 = vrcp.pop 8.0
        %v834 = vmul.f32 %v832, %v833
        %v835 = vsub.f32 %v716, %v834
        %v836 = vsub.f32 %v718, %v834
        %v837 = vmul.f32 %v835, %v835
        %v838 = vsel %vm825, %v837, 0.0
        %839 = vadd.xlane.f32.xlu0 %v838
        %v840 = vpop.xlane.xlu0 %839
        %v841 = vmul.f32 %v836, %v836
        %v842 = vsel %vm825, %v841, 0.0
        %843 = vadd.xlane.f32.xlu0 %v842
        %v844 = vpop.xlane.xlu0 %843
        %v846 = vsel %vm825, %v835, 0
        %v849 = vsel %vm825, %v836, 0
        %851 = vmatprep.subr.mxu0 0.0
        %852 = vmatpush1.xpose.msra.mxu0 %v849
        %853 = vmatprep.subr.mxu0 0.0
        %854 = vmatpush1.xpose.msra.mxu0 0.0
        %855 = vmatprep.subr.mxu0 0.0
        %856 = vmatpush1.xpose.msra.mxu0 0.0
        %857 = vmatprep.subr.mxu0 0.0
        %858 = vmatpush1.xpose.msra.mxu0 0.0
        %859 = vmatprep.subr.mxu0 0.0
        %860 = vmatpush1.xpose.msra.mxu0 0.0
        %861 = vmatprep.subr.mxu0 0.0
        %862 = vmatpush1.xpose.msra.mxu0 0.0
        %863 = vmatprep.subr.mxu0 0.0
        %864 = vmatpush1.xpose.msra.mxu0 0.0
        %865 = vmatprep.subr.mxu0 0.0
        %866 = vmatpush1.xpose.msra.mxu0 0.0
        %867 = vmatprep.subr.mxu0 0.0
        %868 = vmatpush1.xpose.msra.mxu0 0.0
        %869 = vmatprep.subr.mxu0 0.0
        %870 = vmatpush1.xpose.msra.mxu0 0.0
        %871 = vmatprep.subr.mxu0 0.0
        %872 = vmatpush1.xpose.msra.mxu0 0.0
        %873 = vmatprep.subr.mxu0 0.0
        %874 = vmatpush1.xpose.msra.mxu0 0.0
        %875 = vmatprep.subr.mxu0 0.0
        %876 = vmatpush1.xpose.msra.mxu0 0.0
        %877 = vmatprep.subr.mxu0 0.0
        %878 = vmatpush1.xpose.msra.mxu0 0.0
        %879 = vmatprep.subr.mxu0 0.0
        %880 = vmatpush1.xpose.msra.mxu0 0.0
        %881 = vmatprep.subr.mxu0 0.0
        %882 = vmatpush1.xpose.msra.mxu0 0.0
        %883 = vmatprep.subr.mxu0 0.0
        %884 = vmatpush1.xpose.msra.mxu0 0.0
        %885 = vmatprep.subr.mxu0 0.0
        %886 = vmatpush1.xpose.msra.mxu0 0.0
        %887 = vmatprep.subr.mxu0 0.0
        %888 = vmatpush1.xpose.msra.mxu0 0.0
        %889 = vmatprep.subr.mxu0 0.0
        %890 = vmatpush1.xpose.msra.mxu0 0.0
        %891 = vmatprep.subr.mxu0 0.0
        %892 = vmatpush1.xpose.msra.mxu0 0.0
        %893 = vmatprep.subr.mxu0 0.0
        %894 = vmatpush1.xpose.msra.mxu0 0.0
        %895 = vmatprep.subr.mxu0 0.0
        %896 = vmatpush1.xpose.msra.mxu0 0.0
        %897 = vmatprep.subr.mxu0 0.0
        %898 = vmatpush1.xpose.msra.mxu0 0.0
        %899 = vmatprep.subr.mxu0 0.0
        %900 = vmatpush1.xpose.msra.mxu0 0.0
        %901 = vmatprep.subr.mxu0 0.0
        %902 = vmatpush1.xpose.msra.mxu0 0.0
        %903 = vmatprep.subr.mxu0 0.0
        %904 = vmatpush1.xpose.msra.mxu0 0.0
        %905 = vmatprep.subr.mxu0 0.0
        %906 = vmatpush1.xpose.msra.mxu0 0.0
        %907 = vmatprep.subr.mxu0 0.0
        %908 = vmatpush1.xpose.msra.mxu0 0.0
        %909 = vmatprep.subr.mxu0 0.0
        %910 = vmatpush1.xpose.msra.mxu0 0.0
        %911 = vmatprep.subr.mxu0 0.0
        %912 = vmatpush1.xpose.msra.mxu0 0.0
        %913 = vmatprep.subr.mxu0 0.0
        %914 = vmatpush1.xpose.msra.mxu0 0.0
        %915 = vmatprep.mubr.f32.mxu0 0.0
        %916 = vmatmul.mubr.f32.gmra.mrb[0].mxu0 %v846
        %v917 = vpop.f32.mrb[0].mxu0
        %v918 = vadd.f32 0.0, %v917
        %v919 = vpop.f32.mrb[0].mxu0
        %920 = vdwg.mxu0
        %v922 = vlaneseq
        %v923 = vand.u32 %v922, 127
        %v924 = vlaneseq
        %v925 = vshrl.u32 %v924, 7
        %v926 = vsub.s32 %v923, %v925
        %v927 = vrot.slane %v844, %v926
        %vm928 = vcmask 1041409
        %vm929 = vcmask 1042434
        %v930 = vsel %vm929, %v927, %v927
        %vm931 = vcmask 1043459
        %v932 = vsel %vm931, %v927, %v930
        %vm933 = vcmask 1044484
        %v934 = vsel %vm933, %v927, %v932
        %vm935 = vcmask 1045509
        %v936 = vsel %vm935, %v927, %v934
        %vm937 = vcmask 1046534
        %v938 = vsel %vm937, %v927, %v936
        %vm939 = vcmask 1047559
        %v940 = vsel %vm939, %v927, %v938
        %v942 = vadd.f32 %v840, %v940
        %v943 = vmul.f32 %v918, 2.0
        %v944 = vsub.f32 %v942, %v943
        %v945 = vmax.f32 %v944, 0.0
        %v946 = vld [vmem:[#allocation4] sm:$0xff]
        %v947 = vld [vmem:[#allocation4 + $0x8] sm:$0xff]
        %v948 = vld [vmem:[%s5] sm:$0xff]
        %v949 = vld [vmem:[%s5 + $0x8] sm:$0xff]
        %v950 = vld [vmem:[%s5 + $0x10] sm:$0xff]
        %v951 = vld [vmem:[%s5 + $0x18] sm:$0xff]
        %v952 = vld [vmem:[%s5 + $0x20] sm:$0xff]
        %v953 = vld [vmem:[%s5 + $0x28] sm:$0xff]
        %v954 = vld [vmem:[%s5 + $0x30] sm:$0xff]
        %v955 = vld [vmem:[%s5 + $0x38] sm:$0xff]
        %vm956 = vcmask 261120
        %v958 = vsel %vm956, %v717, 0
        %960 = vmatprep.subr.mxu0 %v949
        %961 = vmatpush1.msra.mxu0 %v948
        %962 = vmatprep.subr.mxu0 %v951
        %963 = vmatpush1.msra.mxu0 %v950
        %964 = vmatprep.subr.mxu0 %v953
        %965 = vmatpush1.msra.mxu0 %v952
        %966 = vmatprep.subr.mxu0 %v955
        %967 = vmatpush1.msra.mxu0 %v954
        %968 = vmatprep.subr.mxu0 0.0
        %969 = vmatpush1.msra.mxu0 0.0
        %970 = vmatprep.subr.mxu0 0.0
        %971 = vmatpush1.msra.mxu0 0.0
        %972 = vmatprep.subr.mxu0 0.0
        %973 = vmatpush1.msra.mxu0 0.0
        %974 = vmatprep.subr.mxu0 0.0
        %975 = vmatpush1.msra.mxu0 0.0
        %976 = vmatprep.subr.mxu0 0.0
        %977 = vmatpush1.msra.mxu0 0.0
        %978 = vmatprep.subr.mxu0 0.0
        %979 = vmatpush1.msra.mxu0 0.0
        %980 = vmatprep.subr.mxu0 0.0
        %981 = vmatpush1.msra.mxu0 0.0
        %982 = vmatprep.subr.mxu0 0.0
        %983 = vmatpush1.msra.mxu0 0.0
        %984 = vmatprep.subr.mxu0 0.0
        %985 = vmatpush1.msra.mxu0 0.0
        %986 = vmatprep.subr.mxu0 0.0
        %987 = vmatpush1.msra.mxu0 0.0
        %988 = vmatprep.subr.mxu0 0.0
        %989 = vmatpush1.msra.mxu0 0.0
        %990 = vmatprep.subr.mxu0 0.0
        %991 = vmatpush1.msra.mxu0 0.0
        %992 = vmatprep.subr.mxu0 0.0
        %993 = vmatpush1.msra.mxu0 0.0
        %994 = vmatprep.subr.mxu0 0.0
        %995 = vmatpush1.msra.mxu0 0.0
        %996 = vmatprep.subr.mxu0 0.0
        %997 = vmatpush1.msra.mxu0 0.0
        %998 = vmatprep.subr.mxu0 0.0
        %999 = vmatpush1.msra.mxu0 0.0
        %1000 = vmatprep.subr.mxu0 0.0
        %1001 = vmatpush1.msra.mxu0 0.0
        %1002 = vmatprep.subr.mxu0 0.0
        %1003 = vmatpush1.msra.mxu0 0.0
        %1004 = vmatprep.subr.mxu0 0.0
        %1005 = vmatpush1.msra.mxu0 0.0
        %1006 = vmatprep.subr.mxu0 0.0
        %1007 = vmatpush1.msra.mxu0 0.0
        %1008 = vmatprep.subr.mxu0 0.0
        %1009 = vmatpush1.msra.mxu0 0.0
        %1010 = vmatprep.subr.mxu0 0.0
        %1011 = vmatpush1.msra.mxu0 0.0
        %1012 = vmatprep.subr.mxu0 0.0
        %1013 = vmatpush1.msra.mxu0 0.0
        %1014 = vmatprep.subr.mxu0 0.0
        %1015 = vmatpush1.msra.mxu0 0.0
        %1016 = vmatprep.subr.mxu0 0.0
        %1017 = vmatpush1.msra.mxu0 0.0
        %1018 = vmatprep.subr.mxu0 0.0
        %1019 = vmatpush1.msra.mxu0 0.0
        %1020 = vmatprep.subr.mxu0 0.0
        %1021 = vmatpush1.msra.mxu0 0.0
        %1022 = vmatprep.subr.mxu0 0.0
        %1023 = vmatpush1.msra.mxu0 0.0
        %1024 = vmatprep.mubr.f32.mxu0 0.0
        %1025 = vmatmul.mubr.f32.gmra.mrb[0].mxu0 %v958
        %v1026 = vpop.f32.mrb[0].mxu0
        %v1027 = vadd.f32 0.0, %v1026
        %v1028 = vpop.f32.mrb[0].mxu0
        %v1029 = vadd.f32 0.0, %v1028
        %1030 = vdwg.mxu0
        %v1031 = vld [vmem:[%s6] sm:$0x3]
        %v1034 = vcombine.low %v946, %v947
        %v1035 = vcombine.high %v946, %v947
        %v1037 = vunpack.c.l.s4 1966171168
        %v1038 = vunpack.c.0.s8 %v1037
        %v1039 = vlaneseq
        %v1040 = vshrl.u32 %v1039, 7
        %v1041 = vsub.s32 %v1038, %v1040
        %v1042 = vrot.slane %v1034, %v1041
        %v1044 = vunpack.c.l.s4 1966171168
        %v1045 = vunpack.c.0.s8 %v1044
        %v1046 = vlaneseq
        %v1047 = vshrl.u32 %v1046, 7
        %v1048 = vsub.s32 %v1045, %v1047
        %v1049 = vrot.slane %v1035, %v1048
        %v1050 = vcombine.high %v1042, %v1042
        %v1051 = vcombine.high %v1049, %v1049
        %v1053 = vunpack.c.l.s4 1966171168
        %v1054 = vunpack.c.0.s8 %v1053
        %v1055 = vlaneseq
        %v1056 = vshrl.u32 %v1055, 7
        %v1057 = vsub.s32 %v1054, %v1056
        %v1058 = vrot.slane %v1042, %v1057
        %v1060 = vunpack.c.l.s4 1966171168
        %v1061 = vunpack.c.0.s8 %v1060
        %v1062 = vlaneseq
        %v1063 = vshrl.u32 %v1062, 7
        %v1064 = vsub.s32 %v1061, %v1063
        %v1065 = vrot.slane %v1049, %v1064
        %v1067 = vunpack.c.l.s4 1966171168
        %v1068 = vunpack.c.0.s8 %v1067
        %v1069 = vlaneseq
        %v1070 = vshrl.u32 %v1069, 7
        %v1071 = vsub.s32 %v1068, %v1070
        %v1072 = vrot.slane %v1050, %v1071
        %v1074 = vunpack.c.l.s4 1966171168
        %v1075 = vunpack.c.0.s8 %v1074
        %v1076 = vlaneseq
        %v1077 = vshrl.u32 %v1076, 7
        %v1078 = vsub.s32 %v1075, %v1077
        %v1079 = vrot.slane %v1051, %v1078
        %v1080 = vcombine.high %v1058, %v1058
        %v1081 = vcombine.high %v1065, %v1065
        %v1082 = vcombine.high %v1072, %v1072
        %v1083 = vcombine.high %v1079, %v1079
        %v1084 = vlaneseq
        %v1085 = vshrl.u32 %v1084, 7
        %v1086 = vsub.s32 0, %v1085
        %v1087 = vrot.slane %v1058, %v1086
        %v1088 = vlaneseq
        %v1089 = vshrl.u32 %v1088, 7
        %v1090 = vsub.s32 1, %v1089
        %v1091 = vrot.slane %v1058, %v1090
        %v1092 = vlaneseq
        %v1093 = vshrl.u32 %v1092, 7
        %v1094 = vsub.s32 0, %v1093
        %v1095 = vrot.slane %v1072, %v1094
        %v1096 = vlaneseq
        %v1097 = vshrl.u32 %v1096, 7
        %v1098 = vsub.s32 1, %v1097
        %v1099 = vrot.slane %v1072, %v1098
        %v1100 = vlaneseq
        %v1101 = vshrl.u32 %v1100, 7
        %v1102 = vsub.s32 0, %v1101
        %v1103 = vrot.slane %v1080, %v1102
        %v1104 = vlaneseq
        %v1105 = vshrl.u32 %v1104, 7
        %v1106 = vsub.s32 1, %v1105
        %v1107 = vrot.slane %v1080, %v1106
        %v1108 = vlaneseq
        %v1109 = vshrl.u32 %v1108, 7
        %v1110 = vsub.s32 0, %v1109
        %v1111 = vrot.slane %v1082, %v1110
        %v1112 = vlaneseq
        %v1113 = vshrl.u32 %v1112, 7
        %v1114 = vsub.s32 1, %v1113
        %v1115 = vrot.slane %v1082, %v1114
        %v1116 = vlaneseq
        %v1117 = vshrl.u32 %v1116, 7
        %v1118 = vsub.s32 0, %v1117
        %v1119 = vrot.slane %v1065, %v1118
        %v1120 = vlaneseq
        %v1121 = vshrl.u32 %v1120, 7
        %v1122 = vsub.s32 1, %v1121
        %v1123 = vrot.slane %v1065, %v1122
        %v1124 = vlaneseq
        %v1125 = vshrl.u32 %v1124, 7
        %v1126 = vsub.s32 0, %v1125
        %v1127 = vrot.slane %v1079, %v1126
        %v1128 = vlaneseq
        %v1129 = vshrl.u32 %v1128, 7
        %v1130 = vsub.s32 1, %v1129
        %v1131 = vrot.slane %v1079, %v1130
        %v1132 = vlaneseq
        %v1133 = vshrl.u32 %v1132, 7
        %v1134 = vsub.s32 0, %v1133
        %v1135 = vrot.slane %v1081, %v1134
        %v1136 = vlaneseq
        %v1137 = vshrl.u32 %v1136, 7
        %v1138 = vsub.s32 1, %v1137
        %v1139 = vrot.slane %v1081, %v1138
        %v1140 = vlaneseq
        %v1141 = vshrl.u32 %v1140, 7
        %v1142 = vsub.s32 0, %v1141
        %v1143 = vrot.slane %v1083, %v1142
        %v1144 = vlaneseq
        %v1145 = vshrl.u32 %v1144, 7
        %v1146 = vsub.s32 1, %v1145
        %v1147 = vrot.slane %v1083, %v1146
        %v1164 = vadd.f32 %v1087, %v1027
        %v1165 = vadd.f32 %v1091, %v1029
        %v1166 = vadd.f32 %v1095, %v1027
        %v1167 = vadd.f32 %v1099, %v1029
        %v1168 = vadd.f32 %v1103, %v1027
        %v1169 = vadd.f32 %v1107, %v1029
        %v1170 = vadd.f32 %v1111, %v1027
        %v1171 = vadd.f32 %v1115, %v1029
        %v1172 = vadd.f32 %v1119, %v1027
        %v1173 = vadd.f32 %v1123, %v1029
        %v1174 = vadd.f32 %v1127, %v1027
        %v1175 = vadd.f32 %v1131, %v1029
        %v1176 = vadd.f32 %v1135, %v1027
        %v1177 = vadd.f32 %v1139, %v1029
        %v1178 = vadd.f32 %v1143, %v1027
        %v1179 = vadd.f32 %v1147, %v1029
        %v1180 = vlaneseq
        %v1181 = vshrl.u32 %v1180, 7
        %v1182 = vsub.s32 0, %v1181
        %v1183 = vrot.slane %v945, %v1182
        %1185 = vbcast.lane.b32.xlu0 %v1183, 256
        %v1186 = vpop.permute.xlu0 %1185
        %v1187 = vlaneseq
        %v1188 = vshrl.u32 %v1187, 7
        %v1189 = vsub.s32 1, %v1188
        %v1190 = vrot.slane %v945, %v1189
        %1192 = vbcast.lane.b32.xlu0 %v1190, 256
        %v1193 = vpop.permute.xlu0 %1192
        %v1194 = vlaneseq
        %v1195 = vshrl.u32 %v1194, 7
        %v1196 = vsub.s32 2, %v1195
        %v1197 = vrot.slane %v945, %v1196
        %1199 = vbcast.lane.b32.xlu0 %v1197, 256
        %v1200 = vpop.permute.xlu0 %1199
        %v1201 = vlaneseq
        %v1202 = vshrl.u32 %v1201, 7
        %v1203 = vsub.s32 3, %v1202
        %v1204 = vrot.slane %v945, %v1203
        %1206 = vbcast.lane.b32.xlu0 %v1204, 256
        %v1207 = vpop.permute.xlu0 %1206
        %v1208 = vlaneseq
        %v1209 = vshrl.u32 %v1208, 7
        %v1210 = vsub.s32 4, %v1209
        %v1211 = vrot.slane %v945, %v1210
        %1213 = vbcast.lane.b32.xlu0 %v1211, 256
        %v1214 = vpop.permute.xlu0 %1213
        %v1215 = vlaneseq
        %v1216 = vshrl.u32 %v1215, 7
        %v1217 = vsub.s32 5, %v1216
        %v1218 = vrot.slane %v945, %v1217
        %1220 = vbcast.lane.b32.xlu0 %v1218, 256
        %v1221 = vpop.permute.xlu0 %1220
        %v1222 = vlaneseq
        %v1223 = vshrl.u32 %v1222, 7
        %v1224 = vsub.s32 6, %v1223
        %v1225 = vrot.slane %v945, %v1224
        %1227 = vbcast.lane.b32.xlu0 %v1225, 256
        %v1228 = vpop.permute.xlu0 %1227
        %v1229 = vlaneseq
        %v1230 = vshrl.u32 %v1229, 7
        %v1231 = vsub.s32 7, %v1230
        %v1232 = vrot.slane %v945, %v1231
        %1234 = vbcast.lane.b32.xlu0 %v1232, 256
        %v1235 = vpop.permute.xlu0 %1234
        %v1237 = vlaneseq
        %v1238 = vshrl.u32 %v1237, 7
        %v1239 = vsub.s32 0, %v1238
        %v1240 = vrot.slane %v1031, %v1239
        %v1241 = vlaneseq
        %v1242 = vshrl.u32 %v1241, 7
        %v1243 = vsub.s32 1, %v1242
        %v1244 = vrot.slane %v1031, %v1243
        %v1247 = vmul.f32 %v1186, %v1240
        %v1248 = vmul.f32 %v1186, %v1244
        %v1249 = vmul.f32 %v1193, %v1240
        %v1250 = vmul.f32 %v1193, %v1244
        %v1251 = vmul.f32 %v1200, %v1240
        %v1252 = vmul.f32 %v1200, %v1244
        %v1253 = vmul.f32 %v1207, %v1240
        %v1254 = vmul.f32 %v1207, %v1244
        %v1255 = vmul.f32 %v1214, %v1240
        %v1256 = vmul.f32 %v1214, %v1244
        %v1257 = vmul.f32 %v1221, %v1240
        %v1258 = vmul.f32 %v1221, %v1244
        %v1259 = vmul.f32 %v1228, %v1240
        %v1260 = vmul.f32 %v1228, %v1244
        %v1261 = vmul.f32 %v1235, %v1240
        %v1262 = vmul.f32 %v1235, %v1244
        %v1263 = vadd.f32 %v1164, %v1247
        %v1264 = vadd.f32 %v1165, %v1248
        %v1265 = vadd.f32 %v1166, %v1249
        %v1266 = vadd.f32 %v1167, %v1250
        %v1267 = vadd.f32 %v1168, %v1251
        %v1268 = vadd.f32 %v1169, %v1252
        %v1269 = vadd.f32 %v1170, %v1253
        %v1270 = vadd.f32 %v1171, %v1254
        %v1271 = vadd.f32 %v1172, %v1255
        %v1272 = vadd.f32 %v1173, %v1256
        %v1273 = vadd.f32 %v1174, %v1257
        %v1274 = vadd.f32 %v1175, %v1258
        %v1275 = vadd.f32 %v1176, %v1259
        %v1276 = vadd.f32 %v1177, %v1260
        %v1277 = vadd.f32 %v1178, %v1261
        %v1278 = vadd.f32 %v1179, %v1262
        %v1279 = vxor.u32 %v1263, 2147483648
        %v1280 = vxor.u32 %v1264, 2147483648
        %v1281 = vxor.u32 %v1265, 2147483648
        %v1282 = vxor.u32 %v1266, 2147483648
        %v1283 = vxor.u32 %v1267, 2147483648
        %v1284 = vxor.u32 %v1268, 2147483648
        %v1285 = vxor.u32 %v1269, 2147483648
        %v1286 = vxor.u32 %v1270, 2147483648
        %v1287 = vxor.u32 %v1271, 2147483648
        %v1288 = vxor.u32 %v1272, 2147483648
        %v1289 = vxor.u32 %v1273, 2147483648
        %v1290 = vxor.u32 %v1274, 2147483648
        %v1291 = vxor.u32 %v1275, 2147483648
        %v1292 = vxor.u32 %v1276, 2147483648
        %v1293 = vxor.u32 %v1277, 2147483648
        %v1294 = vxor.u32 %v1278, 2147483648
        %v1295 = vmul.f32 %v1279, 1.442695
        %v1296 = vpow.pop %v1295
        %v1297 = vmul.f32 %v1280, 1.442695
        %v1298 = vpow.pop %v1297
        %v1299 = vmul.f32 %v1281, 1.442695
        %v1300 = vpow.pop %v1299
        %v1301 = vmul.f32 %v1282, 1.442695
        %v1302 = vpow.pop %v1301
        %v1303 = vmul.f32 %v1283, 1.442695
        %v1304 = vpow.pop %v1303
        %v1305 = vmul.f32 %v1284, 1.442695
        %v1306 = vpow.pop %v1305
        %v1307 = vmul.f32 %v1285, 1.442695
        %v1308 = vpow.pop %v1307
        %v1309 = vmul.f32 %v1286, 1.442695
        %v1310 = vpow.pop %v1309
        %v1311 = vmul.f32 %v1287, 1.442695
        %v1312 = vpow.pop %v1311
        %v1313 = vmul.f32 %v1288, 1.442695
        %v1314 = vpow.pop %v1313
        %v1315 = vmul.f32 %v1289, 1.442695
        %v1316 = vpow.pop %v1315
        %v1317 = vmul.f32 %v1290, 1.442695
        %v1318 = vpow.pop %v1317
        %v1319 = vmul.f32 %v1291, 1.442695
        %v1320 = vpow.pop %v1319
        %v1321 = vmul.f32 %v1292, 1.442695
        %v1322 = vpow.pop %v1321
        %v1323 = vmul.f32 %v1293, 1.442695
        %v1324 = vpow.pop %v1323
        %v1325 = vmul.f32 %v1294, 1.442695
        %v1326 = vpow.pop %v1325
        %v1327 = vadd.f32 %v1296, 1.0
        %v1328 = vadd.f32 %v1298, 1.0
        %v1329 = vadd.f32 %v1300, 1.0
        %v1330 = vadd.f32 %v1302, 1.0
        %v1331 = vadd.f32 %v1304, 1.0
        %v1332 = vadd.f32 %v1306, 1.0
        %v1333 = vadd.f32 %v1308, 1.0
        %v1334 = vadd.f32 %v1310, 1.0
        %v1335 = vadd.f32 %v1312, 1.0
        %v1336 = vadd.f32 %v1314, 1.0
        %v1337 = vadd.f32 %v1316, 1.0
        %v1338 = vadd.f32 %v1318, 1.0
        %v1339 = vadd.f32 %v1320, 1.0
        %v1340 = vadd.f32 %v1322, 1.0
        %v1341 = vadd.f32 %v1324, 1.0
        %v1342 = vadd.f32 %v1326, 1.0
        %v1343 = vrcp.pop %v1327
        %v1344 = vmul.f32 1.0, %v1343
        %v1345 = vrcp.pop %v1328
        %v1346 = vmul.f32 1.0, %v1345
        %v1347 = vrcp.pop %v1329
        %v1348 = vmul.f32 1.0, %v1347
        %v1349 = vrcp.pop %v1330
        %v1350 = vmul.f32 1.0, %v1349
        %v1351 = vrcp.pop %v1331
        %v1352 = vmul.f32 1.0, %v1351
        %v1353 = vrcp.pop %v1332
        %v1354 = vmul.f32 1.0, %v1353
        %v1355 = vrcp.pop %v1333
        %v1356 = vmul.f32 1.0, %v1355
        %v1357 = vrcp.pop %v1334
        %v1358 = vmul.f32 1.0, %v1357
        %v1359 = vrcp.pop %v1335
        %v1360 = vmul.f32 1.0, %v1359
        %v1361 = vrcp.pop %v1336
        %v1362 = vmul.f32 1.0, %v1361
        %v1363 = vrcp.pop %v1337
        %v1364 = vmul.f32 1.0, %v1363
        %v1365 = vrcp.pop %v1338
        %v1366 = vmul.f32 1.0, %v1365
        %v1367 = vrcp.pop %v1339
        %v1368 = vmul.f32 1.0, %v1367
        %v1369 = vrcp.pop %v1340
        %v1370 = vmul.f32 1.0, %v1369
        %v1371 = vrcp.pop %v1341
        %v1372 = vmul.f32 1.0, %v1371
        %v1373 = vrcp.pop %v1342
        %v1374 = vmul.f32 1.0, %v1373
        %v1375 = vmul.f32 %v1263, %v1344
        %v1376 = vmul.f32 %v1264, %v1346
        %v1377 = vmul.f32 %v1265, %v1348
        %v1378 = vmul.f32 %v1266, %v1350
        %v1379 = vmul.f32 %v1267, %v1352
        %v1380 = vmul.f32 %v1268, %v1354
        %v1381 = vmul.f32 %v1269, %v1356
        %v1382 = vmul.f32 %v1270, %v1358
        %v1383 = vmul.f32 %v1271, %v1360
        %v1384 = vmul.f32 %v1272, %v1362
        %v1385 = vmul.f32 %v1273, %v1364
        %v1386 = vmul.f32 %v1274, %v1366
        %v1387 = vmul.f32 %v1275, %v1368
        %v1388 = vmul.f32 %v1276, %v1370
        %v1389 = vmul.f32 %v1277, %v1372
        %v1390 = vmul.f32 %v1278, %v1374
        %v1391 = vld [vmem:[%s8] sm:$0xff]
        %v1392 = vld [vmem:[%s8 + $0x8] sm:$0xff]
        %v1393 = vld [vmem:[%s8 + $0x10] sm:$0xff]
        %v1394 = vld [vmem:[%s8 + $0x18] sm:$0xff]
        %v1395 = vld [vmem:[%s8 + $0x20] sm:$0xff]
        %v1396 = vld [vmem:[%s8 + $0x28] sm:$0xff]
        %v1397 = vld [vmem:[%s8 + $0x30] sm:$0xff]
        %v1398 = vld [vmem:[%s8 + $0x38] sm:$0xff]
        %v1399 = vld [vmem:[%s8 + $0x40] sm:$0xff]
        %v1400 = vld [vmem:[%s8 + $0x48] sm:$0xff]
        %v1401 = vld [vmem:[%s8 + $0x50] sm:$0xff]
        %v1402 = vld [vmem:[%s8 + $0x58] sm:$0xff]
        %v1403 = vld [vmem:[%s8 + $0x60] sm:$0xff]
        %v1404 = vld [vmem:[%s8 + $0x68] sm:$0xff]
        %v1405 = vld [vmem:[%s8 + $0x70] sm:$0xff]
        %v1406 = vld [vmem:[%s8 + $0x78] sm:$0xff]
        %v1407 = vld [vmem:[%s8 + $0x80] sm:$0x3]
        %v1408 = vld [vmem:[%s9] sm:$0x1]
        %v1410 = vlaneseq
        %v1411 = vshrl.u32 %v1410, 7
        %v1412 = vsub.s32 0, %v1411
        %v1413 = vrot.slane %v1408, %v1412
        %vm1415 = vcmask 15360
        %v1417 = vsel %vm1415, %v1376, 0
        %v1420 = vsel %vm1415, %v1378, 0
        %v1423 = vsel %vm1415, %v1380, 0
        %v1426 = vsel %vm1415, %v1382, 0
        %v1429 = vsel %vm1415, %v1384, 0
        %v1432 = vsel %vm1415, %v1386, 0
        %v1435 = vsel %vm1415, %v1388, 0
        %v1438 = vsel %vm1415, %v1390, 0
        %vm1440 = vcmask 1041408
        %v1442 = vsel %vm1440, %v1407, 0
        %1444 = vmatprep.subr.mxu0 0.0
        %1445 = vmatpush1.msra.mxu0 %v1391
        %1446 = vmatprep.subr.mxu0 0.0
        %1447 = vmatpush1.msra.mxu0 %v1392
        %1448 = vmatprep.subr.mxu0 0.0
        %1449 = vmatpush1.msra.mxu0 %v1393
        %1450 = vmatprep.subr.mxu0 0.0
        %1451 = vmatpush1.msra.mxu0 %v1394
        %1452 = vmatprep.subr.mxu0 0.0
        %1453 = vmatpush1.msra.mxu0 %v1395
        %1454 = vmatprep.subr.mxu0 0.0
        %1455 = vmatpush1.msra.mxu0 %v1396
        %1456 = vmatprep.subr.mxu0 0.0
        %1457 = vmatpush1.msra.mxu0 %v1397
        %1458 = vmatprep.subr.mxu0 0.0
        %1459 = vmatpush1.msra.mxu0 %v1398
        %1460 = vmatprep.subr.mxu0 0.0
        %1461 = vmatpush1.msra.mxu0 %v1399
        %1462 = vmatprep.subr.mxu0 0.0
        %1463 = vmatpush1.msra.mxu0 %v1400
        %1464 = vmatprep.subr.mxu0 0.0
        %1465 = vmatpush1.msra.mxu0 %v1401
        %1466 = vmatprep.subr.mxu0 0.0
        %1467 = vmatpush1.msra.mxu0 %v1402
        %1468 = vmatprep.subr.mxu0 0.0
        %1469 = vmatpush1.msra.mxu0 %v1403
        %1470 = vmatprep.subr.mxu0 0.0
        %1471 = vmatpush1.msra.mxu0 %v1404
        %1472 = vmatprep.subr.mxu0 0.0
        %1473 = vmatpush1.msra.mxu0 %v1405
        %1474 = vmatprep.subr.mxu0 0.0
        %1475 = vmatpush1.msra.mxu0 %v1406
        %1476 = vmatprep.subr.mxu0 0.0
        %1477 = vmatpush1.msra.mxu0 %v1442
        %1478 = vmatprep.subr.mxu0 0.0
        %1479 = vmatpush1.msra.mxu0 0.0
        %1480 = vmatprep.subr.mxu0 0.0
        %1481 = vmatpush1.msra.mxu0 0.0
        %1482 = vmatprep.subr.mxu0 0.0
        %1483 = vmatpush1.msra.mxu0 0.0
        %1484 = vmatprep.subr.mxu0 0.0
        %1485 = vmatpush1.msra.mxu0 0.0
        %1486 = vmatprep.subr.mxu0 0.0
        %1487 = vmatpush1.msra.mxu0 0.0
        %1488 = vmatprep.subr.mxu0 0.0
        %1489 = vmatpush1.msra.mxu0 0.0
        %1490 = vmatprep.subr.mxu0 0.0
        %1491 = vmatpush1.msra.mxu0 0.0
        %1492 = vmatprep.subr.mxu0 0.0
        %1493 = vmatpush1.msra.mxu0 0.0
        %1494 = vmatprep.subr.mxu0 0.0
        %1495 = vmatpush1.msra.mxu0 0.0
        %1496 = vmatprep.subr.mxu0 0.0
        %1497 = vmatpush1.msra.mxu0 0.0
        %1498 = vmatprep.subr.mxu0 0.0
        %1499 = vmatpush1.msra.mxu0 0.0
        %1500 = vmatprep.subr.mxu0 0.0
        %1501 = vmatpush1.msra.mxu0 0.0
        %1502 = vmatprep.subr.mxu0 0.0
        %1503 = vmatpush1.msra.mxu0 0.0
        %1504 = vmatprep.subr.mxu0 0.0
        %1505 = vmatpush1.msra.mxu0 0.0
        %1506 = vmatprep.subr.mxu0 0.0
        %1507 = vmatpush1.msra.mxu0 0.0
        %1508 = vmatprep.mubr.f32.mxu0 %v1417
        %1509 = vmatmul.mubr.f32.gmra.mrb[0].mxu0 %v1375
        %v1510 = vpop.f32.mrb[0].mxu0
        %v1511 = vadd.f32 %v1413, %v1510
        %v1512 = vpop.f32.mrb[0].mxu0
        %1513 = vmatprep.mubr.f32.mxu0 %v1420
        %1514 = vmatmul.mubr.f32.gmra.mrb[0].mxu0 %v1377
        %v1515 = vpop.f32.mrb[0].mxu0
        %v1516 = vadd.f32 %v1413, %v1515
        %v1517 = vpop.f32.mrb[0].mxu0
        %1518 = vmatprep.mubr.f32.mxu0 %v1423
        %1519 = vmatmul.mubr.f32.gmra.mrb[0].mxu0 %v1379
        %v1520 = vpop.f32.mrb[0].mxu0
        %v1521 = vadd.f32 %v1413, %v1520
        %v1522 = vpop.f32.mrb[0].mxu0
        %1523 = vmatprep.mubr.f32.mxu0 %v1426
        %1524 = vmatmul.mubr.f32.gmra.mrb[0].mxu0 %v1381
        %v1525 = vpop.f32.mrb[0].mxu0
        %v1526 = vadd.f32 %v1413, %v1525
        %v1527 = vpop.f32.mrb[0].mxu0
        %1528 = vmatprep.mubr.f32.mxu0 %v1429
        %1529 = vmatmul.mubr.f32.gmra.mrb[0].mxu0 %v1383
        %v1530 = vpop.f32.mrb[0].mxu0
        %v1531 = vadd.f32 %v1413, %v1530
        %v1532 = vpop.f32.mrb[0].mxu0
        %1533 = vmatprep.mubr.f32.mxu0 %v1432
        %1534 = vmatmul.mubr.f32.gmra.mrb[0].mxu0 %v1385
        %v1535 = vpop.f32.mrb[0].mxu0
        %v1536 = vadd.f32 %v1413, %v1535
        %v1537 = vpop.f32.mrb[0].mxu0
        %1538 = vmatprep.mubr.f32.mxu0 %v1435
        %1539 = vmatmul.mubr.f32.gmra.mrb[0].mxu0 %v1387
        %v1540 = vpop.f32.mrb[0].mxu0
        %v1541 = vadd.f32 %v1413, %v1540
        %v1542 = vpop.f32.mrb[0].mxu0
        %1543 = vmatprep.mubr.f32.mxu0 %v1438
        %1544 = vmatmul.mubr.f32.gmra.mrb[0].mxu0 %v1389
        %v1545 = vpop.f32.mrb[0].mxu0
        %v1546 = vadd.f32 %v1413, %v1545
        %v1547 = vpop.f32.mrb[0].mxu0
        %1548 = vdwg.mxu0
        %v1549 = vxor.u32 %v1511, 2147483648
        %v1550 = vxor.u32 %v1516, 2147483648
        %v1551 = vxor.u32 %v1521, 2147483648
        %v1552 = vxor.u32 %v1526, 2147483648
        %v1553 = vxor.u32 %v1531, 2147483648
        %v1554 = vxor.u32 %v1536, 2147483648
        %v1555 = vxor.u32 %v1541, 2147483648
        %v1556 = vxor.u32 %v1546, 2147483648
        %v1557 = vmul.f32 %v1549, 1.442695
        %v1558 = vpow.pop %v1557
        %v1559 = vmul.f32 %v1550, 1.442695
        %v1560 = vpow.pop %v1559
        %v1561 = vmul.f32 %v1551, 1.442695
        %v1562 = vpow.pop %v1561
        %v1563 = vmul.f32 %v1552, 1.442695
        %v1564 = vpow.pop %v1563
        %v1565 = vmul.f32 %v1553, 1.442695
        %v1566 = vpow.pop %v1565
        %v1567 = vmul.f32 %v1554, 1.442695
        %v1568 = vpow.pop %v1567
        %v1569 = vmul.f32 %v1555, 1.442695
        %v1570 = vpow.pop %v1569
        %v1571 = vmul.f32 %v1556, 1.442695
        %v1572 = vpow.pop %v1571
        %v1573 = vadd.f32 %v1558, 1.0
        %v1574 = vadd.f32 %v1560, 1.0
        %v1575 = vadd.f32 %v1562, 1.0
        %v1576 = vadd.f32 %v1564, 1.0
        %v1577 = vadd.f32 %v1566, 1.0
        %v1578 = vadd.f32 %v1568, 1.0
        %v1579 = vadd.f32 %v1570, 1.0
        %v1580 = vadd.f32 %v1572, 1.0
        %v1581 = vrcp.pop %v1573
        %v1582 = vmul.f32 1.0, %v1581
        %v1583 = vrcp.pop %v1574
        %v1584 = vmul.f32 1.0, %v1583
        %v1585 = vrcp.pop %v1575
        %v1586 = vmul.f32 1.0, %v1585
        %v1587 = vrcp.pop %v1576
        %v1588 = vmul.f32 1.0, %v1587
        %v1589 = vrcp.pop %v1577
        %v1590 = vmul.f32 1.0, %v1589
        %v1591 = vrcp.pop %v1578
        %v1592 = vmul.f32 1.0, %v1591
        %v1593 = vrcp.pop %v1579
        %v1594 = vmul.f32 1.0, %v1593
        %v1595 = vrcp.pop %v1580
        %v1596 = vmul.f32 1.0, %v1595
        %v1597 = vmul.f32 %v1511, %v1582
        %v1598 = vmul.f32 %v1516, %v1584
        %v1599 = vmul.f32 %v1521, %v1586
        %v1600 = vmul.f32 %v1526, %v1588
        %v1601 = vmul.f32 %v1531, %v1590
        %v1602 = vmul.f32 %v1536, %v1592
        %v1603 = vmul.f32 %v1541, %v1594
        %v1604 = vmul.f32 %v1546, %v1596
        %v1605 = vld [vmem:[%s10] sm:$0xff]
        %v1606 = vld [vmem:[%s10 + $0x8] sm:$0xff]
        %v1607 = vld [vmem:[%s11] sm:$0x1]
        %v1609 = vlaneseq
        %v1610 = vshrl.u32 %v1609, 7
        %v1611 = vsub.s32 0, %v1610
        %v1612 = vrot.slane %v1607, %v1611
        %vm1614 = vcmask 130048
        %v1616 = vsel %vm1614, %v1597, 0
        %v1619 = vsel %vm1614, %v1598, 0
        %v1622 = vsel %vm1614, %v1599, 0
        %v1625 = vsel %vm1614, %v1600, 0
        %v1628 = vsel %vm1614, %v1601, 0
        %v1631 = vsel %vm1614, %v1602, 0
        %v1634 = vsel %vm1614, %v1603, 0
        %v1637 = vsel %vm1614, %v1604, 0
        %1639 = vmatprep.subr.mxu0 0.0
        %1640 = vmatpush1.msra.mxu0 %v1605
        %1641 = vmatprep.subr.mxu0 0.0
        %1642 = vmatpush1.msra.mxu0 %v1606
        %1643 = vmatprep.subr.mxu0 0.0
        %1644 = vmatpush1.msra.mxu0 0.0
        %1645 = vmatprep.subr.mxu0 0.0
        %1646 = vmatpush1.msra.mxu0 0.0
        %1647 = vmatprep.subr.mxu0 0.0
        %1648 = vmatpush1.msra.mxu0 0.0
        %1649 = vmatprep.subr.mxu0 0.0
        %1650 = vmatpush1.msra.mxu0 0.0
        %1651 = vmatprep.subr.mxu0 0.0
        %1652 = vmatpush1.msra.mxu0 0.0
        %1653 = vmatprep.subr.mxu0 0.0
        %1654 = vmatpush1.msra.mxu0 0.0
        %1655 = vmatprep.subr.mxu0 0.0
        %1656 = vmatpush1.msra.mxu0 0.0
        %1657 = vmatprep.subr.mxu0 0.0
        %1658 = vmatpush1.msra.mxu0 0.0
        %1659 = vmatprep.subr.mxu0 0.0
        %1660 = vmatpush1.msra.mxu0 0.0
        %1661 = vmatprep.subr.mxu0 0.0
        %1662 = vmatpush1.msra.mxu0 0.0
        %1663 = vmatprep.subr.mxu0 0.0
        %1664 = vmatpush1.msra.mxu0 0.0
        %1665 = vmatprep.subr.mxu0 0.0
        %1666 = vmatpush1.msra.mxu0 0.0
        %1667 = vmatprep.subr.mxu0 0.0
        %1668 = vmatpush1.msra.mxu0 0.0
        %1669 = vmatprep.subr.mxu0 0.0
        %1670 = vmatpush1.msra.mxu0 0.0
        %1671 = vmatprep.subr.mxu0 0.0
        %1672 = vmatpush1.msra.mxu0 0.0
        %1673 = vmatprep.subr.mxu0 0.0
        %1674 = vmatpush1.msra.mxu0 0.0
        %1675 = vmatprep.subr.mxu0 0.0
        %1676 = vmatpush1.msra.mxu0 0.0
        %1677 = vmatprep.subr.mxu0 0.0
        %1678 = vmatpush1.msra.mxu0 0.0
        %1679 = vmatprep.subr.mxu0 0.0
        %1680 = vmatpush1.msra.mxu0 0.0
        %1681 = vmatprep.subr.mxu0 0.0
        %1682 = vmatpush1.msra.mxu0 0.0
        %1683 = vmatprep.subr.mxu0 0.0
        %1684 = vmatpush1.msra.mxu0 0.0
        %1685 = vmatprep.subr.mxu0 0.0
        %1686 = vmatpush1.msra.mxu0 0.0
        %1687 = vmatprep.subr.mxu0 0.0
        %1688 = vmatpush1.msra.mxu0 0.0
        %1689 = vmatprep.subr.mxu0 0.0
        %1690 = vmatpush1.msra.mxu0 0.0
        %1691 = vmatprep.subr.mxu0 0.0
        %1692 = vmatpush1.msra.mxu0 0.0
        %1693 = vmatprep.subr.mxu0 0.0
        %1694 = vmatpush1.msra.mxu0 0.0
        %1695 = vmatprep.subr.mxu0 0.0
        %1696 = vmatpush1.msra.mxu0 0.0
        %1697 = vmatprep.subr.mxu0 0.0
        %1698 = vmatpush1.msra.mxu0 0.0
        %1699 = vmatprep.subr.mxu0 0.0
        %1700 = vmatpush1.msra.mxu0 0.0
        %1701 = vmatprep.subr.mxu0 0.0
        %1702 = vmatpush1.msra.mxu0 0.0
        %1703 = vmatprep.mubr.f32.mxu0 0.0
        %1704 = vmatmul.mubr.f32.gmra.mrb[0].mxu0 %v1616
        %v1705 = vpop.f32.mrb[0].mxu0
        %v1706 = vadd.f32 %v1612, %v1705
        %v1707 = vpop.f32.mrb[0].mxu0
        %1708 = vmatprep.mubr.f32.mxu0 0.0
        %1709 = vmatmul.mubr.f32.gmra.mrb[0].mxu0 %v1619
        %v1710 = vpop.f32.mrb[0].mxu0
        %v1711 = vadd.f32 %v1612, %v1710
        %v1712 = vpop.f32.mrb[0].mxu0
        %1713 = vmatprep.mubr.f32.mxu0 0.0
        %1714 = vmatmul.mubr.f32.gmra.mrb[0].mxu0 %v1622
        %v1715 = vpop.f32.mrb[0].mxu0
        %v1716 = vadd.f32 %v1612, %v1715
        %v1717 = vpop.f32.mrb[0].mxu0
        %1718 = vmatprep.mubr.f32.mxu0 0.0
        %1719 = vmatmul.mubr.f32.gmra.mrb[0].mxu0 %v1625
        %v1720 = vpop.f32.mrb[0].mxu0
        %v1721 = vadd.f32 %v1612, %v1720
        %v1722 = vpop.f32.mrb[0].mxu0
        %1723 = vmatprep.mubr.f32.mxu0 0.0
        %1724 = vmatmul.mubr.f32.gmra.mrb[0].mxu0 %v1628
        %v1725 = vpop.f32.mrb[0].mxu0
        %v1726 = vadd.f32 %v1612, %v1725
        %v1727 = vpop.f32.mrb[0].mxu0
        %1728 = vmatprep.mubr.f32.mxu0 0.0
        %1729 = vmatmul.mubr.f32.gmra.mrb[0].mxu0 %v1631
        %v1730 = vpop.f32.mrb[0].mxu0
        %v1731 = vadd.f32 %v1612, %v1730
        %v1732 = vpop.f32.mrb[0].mxu0
        %1733 = vmatprep.mubr.f32.mxu0 0.0
        %1734 = vmatmul.mubr.f32.gmra.mrb[0].mxu0 %v1634
        %v1735 = vpop.f32.mrb[0].mxu0
        %v1736 = vadd.f32 %v1612, %v1735
        %v1737 = vpop.f32.mrb[0].mxu0
        %1738 = vmatprep.mubr.f32.mxu0 0.0
        %1739 = vmatmul.mubr.f32.gmra.mrb[0].mxu0 %v1637
        %v1740 = vpop.f32.mrb[0].mxu0
        %v1741 = vadd.f32 %v1612, %v1740
        %v1742 = vpop.f32.mrb[0].mxu0
        %1743 = vdwg.mxu0
        %v1744 = vxor.u32 %v1706, 2147483648
        %v1745 = vxor.u32 %v1711, 2147483648
        %v1746 = vxor.u32 %v1716, 2147483648
        %v1747 = vxor.u32 %v1721, 2147483648
        %v1748 = vxor.u32 %v1726, 2147483648
        %v1749 = vxor.u32 %v1731, 2147483648
        %v1750 = vxor.u32 %v1736, 2147483648
        %v1751 = vxor.u32 %v1741, 2147483648
        %v1752 = vmul.f32 %v1744, 1.442695
        %v1753 = vpow.pop %v1752
        %v1754 = vmul.f32 %v1745, 1.442695
        %v1755 = vpow.pop %v1754
        %v1756 = vmul.f32 %v1746, 1.442695
        %v1757 = vpow.pop %v1756
        %v1758 = vmul.f32 %v1747, 1.442695
        %v1759 = vpow.pop %v1758
        %v1760 = vmul.f32 %v1748, 1.442695
        %v1761 = vpow.pop %v1760
        %v1762 = vmul.f32 %v1749, 1.442695
        %v1763 = vpow.pop %v1762
        %v1764 = vmul.f32 %v1750, 1.442695
        %v1765 = vpow.pop %v1764
        %v1766 = vmul.f32 %v1751, 1.442695
        %v1767 = vpow.pop %v1766
        %v1768 = vadd.f32 %v1753, 1.0
        %v1769 = vadd.f32 %v1755, 1.0
        %v1770 = vadd.f32 %v1757, 1.0
        %v1771 = vadd.f32 %v1759, 1.0
        %v1772 = vadd.f32 %v1761, 1.0
        %v1773 = vadd.f32 %v1763, 1.0
        %v1774 = vadd.f32 %v1765, 1.0
        %v1775 = vadd.f32 %v1767, 1.0
        %v1776 = vrcp.pop %v1768
        %v1777 = vmul.f32 1.0, %v1776
        %v1778 = vrcp.pop %v1769
        %v1779 = vmul.f32 1.0, %v1778
        %v1780 = vrcp.pop %v1770
        %v1781 = vmul.f32 1.0, %v1780
        %v1782 = vrcp.pop %v1771
        %v1783 = vmul.f32 1.0, %v1782
        %v1784 = vrcp.pop %v1772
        %v1785 = vmul.f32 1.0, %v1784
        %v1786 = vrcp.pop %v1773
        %v1787 = vmul.f32 1.0, %v1786
        %v1788 = vrcp.pop %v1774
        %v1789 = vmul.f32 1.0, %v1788
        %v1790 = vrcp.pop %v1775
        %v1791 = vmul.f32 1.0, %v1790
        %v1792 = vmul.f32 %v1706, %v1777
        %v1793 = vmul.f32 %v1711, %v1779
        %v1794 = vmul.f32 %v1716, %v1781
        %v1795 = vmul.f32 %v1721, %v1783
        %v1796 = vmul.f32 %v1726, %v1785
        %v1797 = vmul.f32 %v1731, %v1787
        %v1798 = vmul.f32 %v1736, %v1789
        %v1799 = vmul.f32 %v1741, %v1791
        %v1800 = vld [vmem:[%s12] sm:$0x1]
        %v1802 = vlaneseq
        %v1803 = vshrl.u32 %v1802, 7
        %v1804 = vsub.s32 0, %v1803
        %v1805 = vrot.slane %v1800, %v1804
        %v1807 = vmul.f32 %v1792, %v1805
        %v1808 = vmul.f32 %v1793, %v1805
        %v1809 = vmul.f32 %v1794, %v1805
        %v1810 = vmul.f32 %v1795, %v1805
        %v1811 = vmul.f32 %v1796, %v1805
        %v1812 = vmul.f32 %v1797, %v1805
        %v1813 = vmul.f32 %v1798, %v1805
        %v1814 = vmul.f32 %v1799, %v1805
        %vm1815 = vcmask 523264
        %v1816 = vsel %vm1815, %v1807, 0.0
        %1817 = vadd.xlane.f32.xlu0 %v1816
        %v1818 = vpop.xlane.xlu0 %1817
        %v1819 = vsel %vm1815, %v1808, 0.0
        %1820 = vadd.xlane.f32.xlu0 %v1819
        %v1821 = vpop.xlane.xlu0 %1820
        %v1822 = vsel %vm1815, %v1809, 0.0
        %1823 = vadd.xlane.f32.xlu0 %v1822
        %v1824 = vpop.xlane.xlu0 %1823
        %v1825 = vsel %vm1815, %v1810, 0.0
        %1826 = vadd.xlane.f32.xlu0 %v1825
        %v1827 = vpop.xlane.xlu0 %1826
        %v1828 = vsel %vm1815, %v1811, 0.0
        %1829 = vadd.xlane.f32.xlu0 %v1828
        %v1830 = vpop.xlane.xlu0 %1829
        %v1831 = vsel %vm1815, %v1812, 0.0
        %1832 = vadd.xlane.f32.xlu0 %v1831
        %v1833 = vpop.xlane.xlu0 %1832
        %v1834 = vsel %vm1815, %v1813, 0.0
        %1835 = vadd.xlane.f32.xlu0 %v1834
        %v1836 = vpop.xlane.xlu0 %1835
        %v1837 = vsel %vm1815, %v1814, 0.0
        %1838 = vadd.xlane.f32.xlu0 %v1837
        %v1839 = vpop.xlane.xlu0 %1838
        %s1840 = sld [smem:[#allocation5]]
        %v1841 = vstv %s1840
        %v1842 = vadd.f32 %v1818, %v1841
        %v1843 = vadd.f32 %v1821, %v1841
        %v1844 = vadd.f32 %v1824, %v1841
        %v1845 = vadd.f32 %v1827, %v1841
        %v1846 = vadd.f32 %v1830, %v1841
        %v1847 = vadd.f32 %v1833, %v1841
        %v1848 = vadd.f32 %v1836, %v1841
        %v1849 = vadd.f32 %v1839, %v1841
        %v1858 = vlaneseq
        %v1859 = vshrl.u32 %v1858, 7
        %v1860 = vsub.s32 %v923, %v1859
        %v1861 = vrot.slane %v1842, %v1860
        %v1862 = vlaneseq
        %v1863 = vshrl.u32 %v1862, 7
        %v1864 = vsub.s32 %v923, %v1863
        %v1865 = vrot.slane %v1843, %v1864
        %v1866 = vlaneseq
        %v1867 = vshrl.u32 %v1866, 7
        %v1868 = vsub.s32 %v923, %v1867
        %v1869 = vrot.slane %v1844, %v1868
        %v1870 = vlaneseq
        %v1871 = vshrl.u32 %v1870, 7
        %v1872 = vsub.s32 %v923, %v1871
        %v1873 = vrot.slane %v1845, %v1872
        %v1874 = vlaneseq
        %v1875 = vshrl.u32 %v1874, 7
        %v1876 = vsub.s32 %v923, %v1875
        %v1877 = vrot.slane %v1846, %v1876
        %v1878 = vlaneseq
        %v1879 = vshrl.u32 %v1878, 7
        %v1880 = vsub.s32 %v923, %v1879
        %v1881 = vrot.slane %v1847, %v1880
        %v1882 = vlaneseq
        %v1883 = vshrl.u32 %v1882, 7
        %v1884 = vsub.s32 %v923, %v1883
        %v1885 = vrot.slane %v1848, %v1884
        %v1886 = vlaneseq
        %v1887 = vshrl.u32 %v1886, 7
        %v1888 = vsub.s32 %v923, %v1887
        %v1889 = vrot.slane %v1849, %v1888
        %v1890 = vsel %vm928, %v1865, %v1861
        %v1891 = vsel %vm929, %v1869, %v1890
        %v1892 = vsel %vm931, %v1873, %v1891
        %v1893 = vsel %vm933, %v1877, %v1892
        %v1894 = vsel %vm935, %v1881, %v1893
        %v1895 = vsel %vm937, %v1885, %v1894
        %v1896 = vsel %vm939, %v1889, %v1895
        %vm1898 = vcmask 64512
        %v1899 = vsel %vm1898, %v1896, 0.0
        %1900 = vadd.xlane.f32.xlu0 %v1899
        %v1901 = vpop.xlane.xlu0 %1900
        %v1902 = vld [vmem:[#allocation3] sm:$0xff]
        %v1903 = vmul.f32 %v1901, %v835
        %v1904 = vsel %vm1898, %v1896, 0
        %1906 = vmatprep.subr.mxu0 0.0
        %1907 = vmatpush1.msra.mxu0 %v836
        %1908 = vmatprep.subr.mxu0 0.0
        %1909 = vmatpush1.msra.mxu0 0.0
        %1910 = vmatprep.subr.mxu0 0.0
        %1911 = vmatpush1.msra.mxu0 0.0
        %1912 = vmatprep.subr.mxu0 0.0
        %1913 = vmatpush1.msra.mxu0 0.0
        %1914 = vmatprep.subr.mxu0 0.0
        %1915 = vmatpush1.msra.mxu0 0.0
        %1916 = vmatprep.subr.mxu0 0.0
        %1917 = vmatpush1.msra.mxu0 0.0
        %1918 = vmatprep.subr.mxu0 0.0
        %1919 = vmatpush1.msra.mxu0 0.0
        %1920 = vmatprep.subr.mxu0 0.0
        %1921 = vmatpush1.msra.mxu0 0.0
        %1922 = vmatprep.subr.mxu0 0.0
        %1923 = vmatpush1.msra.mxu0 0.0
        %1924 = vmatprep.subr.mxu0 0.0
        %1925 = vmatpush1.msra.mxu0 0.0
        %1926 = vmatprep.subr.mxu0 0.0
        %1927 = vmatpush1.msra.mxu0 0.0
        %1928 = vmatprep.subr.mxu0 0.0
        %1929 = vmatpush1.msra.mxu0 0.0
        %1930 = vmatprep.subr.mxu0 0.0
        %1931 = vmatpush1.msra.mxu0 0.0
        %1932 = vmatprep.subr.mxu0 0.0
        %1933 = vmatpush1.msra.mxu0 0.0
        %1934 = vmatprep.subr.mxu0 0.0
        %1935 = vmatpush1.msra.mxu0 0.0
        %1936 = vmatprep.subr.mxu0 0.0
        %1937 = vmatpush1.msra.mxu0 0.0
        %1938 = vmatprep.subr.mxu0 0.0
        %1939 = vmatpush1.msra.mxu0 0.0
        %1940 = vmatprep.subr.mxu0 0.0
        %1941 = vmatpush1.msra.mxu0 0.0
        %1942 = vmatprep.subr.mxu0 0.0
        %1943 = vmatpush1.msra.mxu0 0.0
        %1944 = vmatprep.subr.mxu0 0.0
        %1945 = vmatpush1.msra.mxu0 0.0
        %1946 = vmatprep.subr.mxu0 0.0
        %1947 = vmatpush1.msra.mxu0 0.0
        %1948 = vmatprep.subr.mxu0 0.0
        %1949 = vmatpush1.msra.mxu0 0.0
        %1950 = vmatprep.subr.mxu0 0.0
        %1951 = vmatpush1.msra.mxu0 0.0
        %1952 = vmatprep.subr.mxu0 0.0
        %1953 = vmatpush1.msra.mxu0 0.0
        %1954 = vmatprep.subr.mxu0 0.0
        %1955 = vmatpush1.msra.mxu0 0.0
        %1956 = vmatprep.subr.mxu0 0.0
        %1957 = vmatpush1.msra.mxu0 0.0
        %1958 = vmatprep.subr.mxu0 0.0
        %1959 = vmatpush1.msra.mxu0 0.0
        %1960 = vmatprep.subr.mxu0 0.0
        %1961 = vmatpush1.msra.mxu0 0.0
        %1962 = vmatprep.subr.mxu0 0.0
        %1963 = vmatpush1.msra.mxu0 0.0
        %1964 = vmatprep.subr.mxu0 0.0
        %1965 = vmatpush1.msra.mxu0 0.0
        %1966 = vmatprep.subr.mxu0 0.0
        %1967 = vmatpush1.msra.mxu0 0.0
        %1968 = vmatprep.subr.mxu0 0.0
        %1969 = vmatpush1.msra.mxu0 0.0
        %1970 = vmatprep.mubr.f32.mxu0 0.0
        %1971 = vmatmul.mubr.f32.gmra.mrb[0].mxu0 %v1904
        %v1972 = vpop.f32.mrb[0].mxu0
        %v1973 = vadd.f32 0.0, %v1972
        %v1974 = vpop.f32.mrb[0].mxu0
        %1975 = vdwg.mxu0
        %v1976 = vsub.f32 %v1903, %v1973
        %v1977 = vadd.f32 %v1902, %v1976
        %1978 = vst.msk [vmem:[#allocation3] sm:$0xff] %vm825, %v1977
        %v1979 = vld [vmem:[#allocation2] sm:$0xff]
        %v1980 = vsel %vm1614, %v1597, 0.0
        %v1981 = vrot.slane %v1980, 4
        %v1982 = vadd.f32 %v1980, %v1981
        %v1983 = vrot.slane %v1982, 2
        %v1984 = vadd.f32 %v1982, %v1983
        %v1985 = vrot.slane %v1984, 1
        %v1986 = vadd.f32 %v1984, %v1985
        %v1987 = vsel %vm1614, %v1598, 0.0
        %v1988 = vrot.slane %v1987, 4
        %v1989 = vadd.f32 %v1987, %v1988
        %v1990 = vrot.slane %v1989, 2
        %v1991 = vadd.f32 %v1989, %v1990
        %v1992 = vrot.slane %v1991, 1
        %v1993 = vadd.f32 %v1991, %v1992
        %v1994 = vsel %vm1614, %v1599, 0.0
        %v1995 = vrot.slane %v1994, 4
        %v1996 = vadd.f32 %v1994, %v1995
        %v1997 = vrot.slane %v1996, 2
        %v1998 = vadd.f32 %v1996, %v1997
        %v1999 = vrot.slane %v1998, 1
        %v2000 = vadd.f32 %v1998, %v1999
        %v2001 = vsel %vm1614, %v1600, 0.0
        %v2002 = vrot.slane %v2001, 4
        %v2003 = vadd.f32 %v2001, %v2002
        %v2004 = vrot.slane %v2003, 2
        %v2005 = vadd.f32 %v2003, %v2004
        %v2006 = vrot.slane %v2005, 1
        %v2007 = vadd.f32 %v2005, %v2006
        %v2008 = vsel %vm1614, %v1601, 0.0
        %v2009 = vrot.slane %v2008, 4
        %v2010 = vadd.f32 %v2008, %v2009
        %v2011 = vrot.slane %v2010, 2
        %v2012 = vadd.f32 %v2010, %v2011
        %v2013 = vrot.slane %v2012, 1
        %v2014 = vadd.f32 %v2012, %v2013
        %v2015 = vsel %vm1614, %v1602, 0.0
        %v2016 = vrot.slane %v2015, 4
        %v2017 = vadd.f32 %v2015, %v2016
        %v2018 = vrot.slane %v2017, 2
        %v2019 = vadd.f32 %v2017, %v2018
        %v2020 = vrot.slane %v2019, 1
        %v2021 = vadd.f32 %v2019, %v2020
        %v2022 = vsel %vm1614, %v1603, 0.0
        %v2023 = vrot.slane %v2022, 4
        %v2024 = vadd.f32 %v2022, %v2023
        %v2025 = vrot.slane %v2024, 2
        %v2026 = vadd.f32 %v2024, %v2025
        %v2027 = vrot.slane %v2026, 1
        %v2028 = vadd.f32 %v2026, %v2027
        %v2029 = vsel %vm1614, %v1604, 0.0
        %v2030 = vrot.slane %v2029, 4
        %v2031 = vadd.f32 %v2029, %v2030
        %v2032 = vrot.slane %v2031, 2
        %v2033 = vadd.f32 %v2031, %v2032
        %v2034 = vrot.slane %v2033, 1
        %v2035 = vadd.f32 %v2033, %v2034
        %v2044 = vsel %vm928, %v1993, %v1986
        %v2045 = vsel %vm929, %v2000, %v2044
        %v2046 = vsel %vm931, %v2007, %v2045
        %v2047 = vsel %vm933, %v2014, %v2046
        %v2048 = vsel %vm935, %v2021, %v2047
        %v2049 = vsel %vm937, %v2028, %v2048
        %v2050 = vsel %vm939, %v2035, %v2049
        %v2052 = vadd.f32 %v1979, %v2050
        %2053 = vst.msk [vmem:[#allocation2] sm:$0xff] %vm1614, %v2052
        // Predicated region
        $region101: #{tpu_custom_call.1} parent=95 // pred_check
          %p2054 = pneg %p719
        $region102: #{tpu_custom_call.1} parent=95 // pred_check_branch
          %2056 = sbr.rel (%p2054) target = $region104
        $region103: #{tpu_custom_call.1} parent=95 // pred_region
          %v2057 = vld [vmem:[#allocation2] sm:$0xff]
          %v2058 = vld [vmem:[%s14] sm:$0xff]
          %v2059 = vld [vmem:[%s14 + $0x8] sm:$0xff]
          %v2060 = vld [vmem:[%s14 + $0x10] sm:$0xff]
          %v2061 = vld [vmem:[%s14 + $0x18] sm:$0xff]
          %v2062 = vld [vmem:[%s15] sm:$0xff]
          %v2063 = vld [vmem:[%s15 + $0x8] sm:$0xff]
          %v2065 = vsel %vm1614, %v2057, 0
          %2067 = vmatprep.subr.mxu0 0.0
          %2068 = vmatpush1.msra.mxu0 %v2062
          %2069 = vmatprep.subr.mxu0 0.0
          %2070 = vmatpush1.msra.mxu0 %v2063
          %2071 = vmatprep.subr.mxu0 0.0
          %2072 = vmatpush1.msra.mxu0 0.0
          %2073 = vmatprep.subr.mxu0 0.0
          %2074 = vmatpush1.msra.mxu0 0.0
          %2075 = vmatprep.subr.mxu0 0.0
          %2076 = vmatpush1.msra.mxu0 0.0
          %2077 = vmatprep.subr.mxu0 0.0
          %2078 = vmatpush1.msra.mxu0 0.0
          %2079 = vmatprep.subr.mxu0 0.0
          %2080 = vmatpush1.msra.mxu0 0.0
          %2081 = vmatprep.subr.mxu0 0.0
          %2082 = vmatpush1.msra.mxu0 0.0
          %2083 = vmatprep.subr.mxu0 0.0
          %2084 = vmatpush1.msra.mxu0 0.0
          %2085 = vmatprep.subr.mxu0 0.0
          %2086 = vmatpush1.msra.mxu0 0.0
          %2087 = vmatprep.subr.mxu0 0.0
          %2088 = vmatpush1.msra.mxu0 0.0
          %2089 = vmatprep.subr.mxu0 0.0
          %2090 = vmatpush1.msra.mxu0 0.0
          %2091 = vmatprep.subr.mxu0 0.0
          %2092 = vmatpush1.msra.mxu0 0.0
          %2093 = vmatprep.subr.mxu0 0.0
          %2094 = vmatpush1.msra.mxu0 0.0
          %2095 = vmatprep.subr.mxu0 0.0
          %2096 = vmatpush1.msra.mxu0 0.0
          %2097 = vmatprep.subr.mxu0 0.0
          %2098 = vmatpush1.msra.mxu0 0.0
          %2099 = vmatprep.subr.mxu0 0.0
          %2100 = vmatpush1.msra.mxu0 0.0
          %2101 = vmatprep.subr.mxu0 0.0
          %2102 = vmatpush1.msra.mxu0 0.0
          %2103 = vmatprep.subr.mxu0 0.0
          %2104 = vmatpush1.msra.mxu0 0.0
          %2105 = vmatprep.subr.mxu0 0.0
          %2106 = vmatpush1.msra.mxu0 0.0
          %2107 = vmatprep.subr.mxu0 0.0
          %2108 = vmatpush1.msra.mxu0 0.0
          %2109 = vmatprep.subr.mxu0 0.0
          %2110 = vmatpush1.msra.mxu0 0.0
          %2111 = vmatprep.subr.mxu0 0.0
          %2112 = vmatpush1.msra.mxu0 0.0
          %2113 = vmatprep.subr.mxu0 0.0
          %2114 = vmatpush1.msra.mxu0 0.0
          %2115 = vmatprep.subr.mxu0 0.0
          %2116 = vmatpush1.msra.mxu0 0.0
          %2117 = vmatprep.subr.mxu0 0.0
          %2118 = vmatpush1.msra.mxu0 0.0
          %2119 = vmatprep.subr.mxu0 0.0
          %2120 = vmatpush1.msra.mxu0 0.0
          %2121 = vmatprep.subr.mxu0 0.0
          %2122 = vmatpush1.msra.mxu0 0.0
          %2123 = vmatprep.subr.mxu0 0.0
          %2124 = vmatpush1.msra.mxu0 0.0
          %2125 = vmatprep.subr.mxu0 0.0
          %2126 = vmatpush1.msra.mxu0 0.0
          %2127 = vmatprep.subr.mxu0 0.0
          %2128 = vmatpush1.msra.mxu0 0.0
          %2129 = vmatprep.subr.mxu0 0.0
          %2130 = vmatpush1.msra.mxu0 0.0
          %2131 = vmatprep.mubr.f32.mxu0 0.0
          %2132 = vmatmul.mubr.f32.gmra.mrb[0].mxu0 %v2065
          %v2133 = vpop.f32.mrb[0].mxu0
          %v2134 = vadd.f32 0.0, %v2133
          %v2135 = vpop.f32.mrb[0].mxu0
          %2136 = vdwg.mxu0
          %v2138 = vsel %vm956, %v715, 0
          %2140 = vmatprep.subr.mxu0 0.0
          %2141 = vmatpush1.msra.mxu0 %v2058
          %2142 = vmatprep.subr.mxu0 0.0
          %2143 = vmatpush1.msra.mxu0 %v2059
          %2144 = vmatprep.subr.mxu0 0.0
          %2145 = vmatpush1.msra.mxu0 %v2060
          %2146 = vmatprep.subr.mxu0 0.0
          %2147 = vmatpush1.msra.mxu0 %v2061
          %2148 = vmatprep.subr.mxu0 0.0
          %2149 = vmatpush1.msra.mxu0 0.0
          %2150 = vmatprep.subr.mxu0 0.0
          %2151 = vmatpush1.msra.mxu0 0.0
          %2152 = vmatprep.subr.mxu0 0.0
          %2153 = vmatpush1.msra.mxu0 0.0
          %2154 = vmatprep.subr.mxu0 0.0
          %2155 = vmatpush1.msra.mxu0 0.0
          %2156 = vmatprep.subr.mxu0 0.0
          %2157 = vmatpush1.msra.mxu0 0.0
          %2158 = vmatprep.subr.mxu0 0.0
          %2159 = vmatpush1.msra.mxu0 0.0
          %2160 = vmatprep.subr.mxu0 0.0
          %2161 = vmatpush1.msra.mxu0 0.0
          %2162 = vmatprep.subr.mxu0 0.0
          %2163 = vmatpush1.msra.mxu0 0.0
          %2164 = vmatprep.subr.mxu0 0.0
          %2165 = vmatpush1.msra.mxu0 0.0
          %2166 = vmatprep.subr.mxu0 0.0
          %2167 = vmatpush1.msra.mxu0 0.0
          %2168 = vmatprep.subr.mxu0 0.0
          %2169 = vmatpush1.msra.mxu0 0.0
          %2170 = vmatprep.subr.mxu0 0.0
          %2171 = vmatpush1.msra.mxu0 0.0
          %2172 = vmatprep.subr.mxu0 0.0
          %2173 = vmatpush1.msra.mxu0 0.0
          %2174 = vmatprep.subr.mxu0 0.0
          %2175 = vmatpush1.msra.mxu0 0.0
          %2176 = vmatprep.subr.mxu0 0.0
          %2177 = vmatpush1.msra.mxu0 0.0
          %2178 = vmatprep.subr.mxu0 0.0
          %2179 = vmatpush1.msra.mxu0 0.0
          %2180 = vmatprep.subr.mxu0 0.0
          %2181 = vmatpush1.msra.mxu0 0.0
          %2182 = vmatprep.subr.mxu0 0.0
          %2183 = vmatpush1.msra.mxu0 0.0
          %2184 = vmatprep.subr.mxu0 0.0
          %2185 = vmatpush1.msra.mxu0 0.0
          %2186 = vmatprep.subr.mxu0 0.0
          %2187 = vmatpush1.msra.mxu0 0.0
          %2188 = vmatprep.subr.mxu0 0.0
          %2189 = vmatpush1.msra.mxu0 0.0
          %2190 = vmatprep.subr.mxu0 0.0
          %2191 = vmatpush1.msra.mxu0 0.0
          %2192 = vmatprep.subr.mxu0 0.0
          %2193 = vmatpush1.msra.mxu0 0.0
          %2194 = vmatprep.subr.mxu0 0.0
          %2195 = vmatpush1.msra.mxu0 0.0
          %2196 = vmatprep.subr.mxu0 0.0
          %2197 = vmatpush1.msra.mxu0 0.0
          %2198 = vmatprep.subr.mxu0 0.0
          %2199 = vmatpush1.msra.mxu0 0.0
          %2200 = vmatprep.subr.mxu0 0.0
          %2201 = vmatpush1.msra.mxu0 0.0
          %2202 = vmatprep.subr.mxu0 0.0
          %2203 = vmatpush1.msra.mxu0 0.0
          %2204 = vmatprep.mubr.f32.mxu0 0.0
          %2205 = vmatmul.mubr.f32.gmra.mrb[0].mxu0 %v2138
          %v2206 = vpop.f32.mrb[0].mxu0
          %v2207 = vadd.f32 %v2134, %v2206
          %v2208 = vpop.f32.mrb[0].mxu0
          %2209 = vdwg.mxu0
          %v2210 = vld [vmem:[%s16] sm:$0x1]
          %v2212 = vlaneseq
          %v2213 = vshrl.u32 %v2212, 7
          %v2214 = vsub.s32 0, %v2213
          %v2215 = vrot.slane %v2210, %v2214
          %v2217 = vadd.f32 %v2207, %v2215
          %v2218 = vxor.u32 %v2217, 2147483648
          %v2219 = vmul.f32 %v2218, 1.442695
          %v2220 = vpow.pop %v2219
          %v2221 = vadd.f32 %v2220, 1.0
          %v2222 = vrcp.pop %v2221
          %v2223 = vmul.f32 1.0, %v2222
          %v2224 = vmul.f32 %v2217, %v2223
          %v2225 = vld [vmem:[%s17] sm:$0xff]
          %v2226 = vld [vmem:[%s17 + $0x8] sm:$0xff]
          %v2227 = vld [vmem:[%s17 + $0x10] sm:$0xff]
          %v2228 = vld [vmem:[%s17 + $0x18] sm:$0xff]
          %v2229 = vld [vmem:[%s17 + $0x20] sm:$0xff]
          %v2230 = vld [vmem:[%s17 + $0x28] sm:$0xff]
          %v2231 = vld [vmem:[%s17 + $0x30] sm:$0xff]
          %v2232 = vld [vmem:[%s17 + $0x38] sm:$0xff]
          %v2233 = vld [vmem:[%s18] sm:$0x1]
          %v2235 = vlaneseq
          %v2236 = vshrl.u32 %v2235, 7
          %v2237 = vsub.s32 0, %v2236
          %v2238 = vrot.slane %v2233, %v2237
          %v2241 = vsel %vm1815, %v2224, 0
          %2243 = vmatprep.subr.mxu0 0.0
          %2244 = vmatpush1.msra.mxu0 %v2225
          %2245 = vmatprep.subr.mxu0 0.0
          %2246 = vmatpush1.msra.mxu0 %v2226
          %2247 = vmatprep.subr.mxu0 0.0
          %2248 = vmatpush1.msra.mxu0 %v2227
          %2249 = vmatprep.subr.mxu0 0.0
          %2250 = vmatpush1.msra.mxu0 %v2228
          %2251 = vmatprep.subr.mxu0 0.0
          %2252 = vmatpush1.msra.mxu0 %v2229
          %2253 = vmatprep.subr.mxu0 0.0
          %2254 = vmatpush1.msra.mxu0 %v2230
          %2255 = vmatprep.subr.mxu0 0.0
          %2256 = vmatpush1.msra.mxu0 %v2231
          %2257 = vmatprep.subr.mxu0 0.0
          %2258 = vmatpush1.msra.mxu0 %v2232
          %2259 = vmatprep.subr.mxu0 0.0
          %2260 = vmatpush1.msra.mxu0 0.0
          %2261 = vmatprep.subr.mxu0 0.0
          %2262 = vmatpush1.msra.mxu0 0.0
          %2263 = vmatprep.subr.mxu0 0.0
          %2264 = vmatpush1.msra.mxu0 0.0
          %2265 = vmatprep.subr.mxu0 0.0
          %2266 = vmatpush1.msra.mxu0 0.0
          %2267 = vmatprep.subr.mxu0 0.0
          %2268 = vmatpush1.msra.mxu0 0.0
          %2269 = vmatprep.subr.mxu0 0.0
          %2270 = vmatpush1.msra.mxu0 0.0
          %2271 = vmatprep.subr.mxu0 0.0
          %2272 = vmatpush1.msra.mxu0 0.0
          %2273 = vmatprep.subr.mxu0 0.0
          %2274 = vmatpush1.msra.mxu0 0.0
          %2275 = vmatprep.subr.mxu0 0.0
          %2276 = vmatpush1.msra.mxu0 0.0
          %2277 = vmatprep.subr.mxu0 0.0
          %2278 = vmatpush1.msra.mxu0 0.0
          %2279 = vmatprep.subr.mxu0 0.0
          %2280 = vmatpush1.msra.mxu0 0.0
          %2281 = vmatprep.subr.mxu0 0.0
          %2282 = vmatpush1.msra.mxu0 0.0
          %2283 = vmatprep.subr.mxu0 0.0
          %2284 = vmatpush1.msra.mxu0 0.0
          %2285 = vmatprep.subr.mxu0 0.0
          %2286 = vmatpush1.msra.mxu0 0.0
          %2287 = vmatprep.subr.mxu0 0.0
          %2288 = vmatpush1.msra.mxu0 0.0
          %2289 = vmatprep.subr.mxu0 0.0
          %2290 = vmatpush1.msra.mxu0 0.0
          %2291 = vmatprep.subr.mxu0 0.0
          %2292 = vmatpush1.msra.mxu0 0.0
          %2293 = vmatprep.subr.mxu0 0.0
          %2294 = vmatpush1.msra.mxu0 0.0
          %2295 = vmatprep.subr.mxu0 0.0
          %2296 = vmatpush1.msra.mxu0 0.0
          %2297 = vmatprep.subr.mxu0 0.0
          %2298 = vmatpush1.msra.mxu0 0.0
          %2299 = vmatprep.subr.mxu0 0.0
          %2300 = vmatpush1.msra.mxu0 0.0
          %2301 = vmatprep.subr.mxu0 0.0
          %2302 = vmatpush1.msra.mxu0 0.0
          %2303 = vmatprep.subr.mxu0 0.0
          %2304 = vmatpush1.msra.mxu0 0.0
          %2305 = vmatprep.subr.mxu0 0.0
          %2306 = vmatpush1.msra.mxu0 0.0
          %2307 = vmatprep.mubr.f32.mxu0 0.0
          %2308 = vmatmul.mubr.f32.gmra.mrb[0].mxu0 %v2241
          %v2309 = vpop.f32.mrb[0].mxu0
          %v2310 = vadd.f32 %v2238, %v2309
          %v2311 = vpop.f32.mrb[0].mxu0
          %2312 = vdwg.mxu0
          %v2313 = vadd.f32 %v2310, %v715
          %v2314 = vld [vmem:[#allocation3] sm:$0xff]
          %v2315 = vadd.f32 %v716, %v2314
          %2316 = vst.msk [vmem:[%s686] sm:$0xff] %vm956, %v2313
          %2318 = vrot.lane.b32.xlu0 %v2315, 32
          %v2319 = vpop.permute.xlu0 %2318
          %vm2321 = vcmask 285952
          %2322 = vst.msk [vmem:[%s686] sm:$0xff] %vm2321, %v2319
          %vm2323 = vcmask 1047832
          %2324 = vst.msk [vmem:[%s686] sm:$0xff] %vm2323, 0.0
        $region104: #{tpu_custom_call.1} parent=95 // pred_fallthru
          _
        %s2325 = sand.u32 %s490, 1
        %s2326 = scalar_lea.sflag [#allocation7], %s2325
        %s2327 = sand.u32 %s490, 1
        %s2328 = smul.addr %s2327, 8
        %s2329 = scalar_lea.vmem [#allocation6], %s2328
        // Predicated region
        $region105: #{tpu_custom_call.1} parent=95 // pred_check
          %p2330 = pneg %p500
        $region106: #{tpu_custom_call.1} parent=95 // pred_check_branch
          %2332 = sbr.rel (%p2330) target = $region108
        $region107: #{tpu_custom_call.1} parent=95 // pred_region
          %s2334 = ssub.s32 128, 128
          %2335 = vsyncadd %s2326, %s2334
          %s2336 = sadd.s32 %s40, %s39
          %s2337 = smul.addr %s2336, 128
          %s2338 = scalar_lea.hbm %s19, %s2337
          %s2340 = sshll.u32 %s2329, 4
          %s2341 = int_to_ptr.vmem [resolvable:$true] %s2340
          %2343 = dma.vmem_to_hbm [thread:$0]  %s2341, 128, %s2338, %s2326
        $region108: #{tpu_custom_call.1} parent=95 // pred_fallthru
          _
      $region96: #{tpu_custom_call.1} parent=5 // pred_fallthru
        _
      %p2344 = scmp.le.s32.totalorder 2, %s29
      // Predicated region
      $region109: #{tpu_custom_call.1} parent=5 // pred_check
        %p2345 = pneg %p2344
      $region110: #{tpu_custom_call.1} parent=5 // pred_check_branch
        %2347 = sbr.rel (%p2345) target = $region112
      $region111: #{tpu_custom_call.1} parent=5 // pred_region
        %s2348 = ssub.s32 %s29, 2
        // Predicated region
        $region113: #{tpu_custom_call.1} parent=111 // pred_check
          %p2349 = pneg %p506
        $region114: #{tpu_custom_call.1} parent=111 // pred_check_branch
          %2351 = sbr.rel (%p2349) target = $region116
        $region115: #{tpu_custom_call.1} parent=111 // pred_region
          %s2352 = sand.u32 %s491, 1
          %s2353 = scalar_lea.sflag [#allocation7], %s2352
          %s2354 = sand.u32 %s491, 1
          %s2355 = smul.addr %s2354, 8
          %s2356 = scalar_lea.vmem [#allocation6], %s2355
          %2357 = dma.done %s2353, 128
        $region116: #{tpu_custom_call.1} parent=111 // pred_fallthru
          _
      $region112: #{tpu_custom_call.1} parent=5 // pred_fallthru
        _
    $region6: #{tpu_custom_call.1} parent=1 // loop_footer
      %s33 = sadd.s32 1, %s29
    $region7: #{tpu_custom_call.1} parent=1 // loop_footer_branch
      %28 = sbr.rel target = $region3
    $region8: #{tpu_custom_call.1} parent=1 // loop_exit
      _
    %2358 = vsyncpa [#allocation7], 1
    %s2359 = scalar_lea.sflag [#allocation7], 1
    %2360 = vsyncpa %s2359, 1

</llo_original>
